<compile_context>
chip_gen: v7x
topology: tpu7x:2x2x1
jax: 0.10.0
libtpu: 0.0.40
codegen_flags: <defaults>
</compile_context>

<pallas_src>
import jax
import jax.numpy as jnp
import numpy as np
from jax.experimental import pallas as pl
from jax.experimental.pallas import tpu as pltpu

# ---------------- config (small, consistent with the module) ----------------
MAX_LEN = 8       # config.max_len
WORD_DIM = 32     # config.word_dim
POS_DIM = 8       # config.pos_dim
HIDDEN = 32       # config.hidden_size
LAYERS = 1        # config.layers_num  (fused kernel handles a single layer)
ATT_LEN = 16      # config.att_len
CLASS_NUM = 5     # class_num
VOCAB = 50
BATCH = 2


# --------------------------- fused PA-LSTM kernel ----------------------------
def pa_lstm_kernel(x_ref, p12_ref, mask_ref,
                   wih_ref, whh_ref, b_ref,
                   wh_ref, wq_ref, wso_ref, v_ref, wb_ref, vb_ref,
                   wd_ref, bd_ref, out_ref):
    B, L, Dw = x_ref.shape
    H = whh_ref.shape[0]
    A = wh_ref.shape[-1]
    P2 = p12_ref.shape[-1]

    # ---- LSTM: hoisted input projection (one matmul for all timesteps) ----
    x = x_ref[...]                                                  # [B, L, Dw]
    gx = (jnp.dot(x.reshape(B * L, Dw), wih_ref[...],
                  preferred_element_type=jnp.float32)
          + b_ref[...])                                             # [B*L, 4H]
    gx = gx.reshape(B, L, 4 * H)                                    # [B, L, 4H]

    whh = whh_ref[...]                                              # [H, 4H]
    h = jnp.zeros((B, H), jnp.float32)
    c = jnp.zeros((B, H), jnp.float32)
    t_sel = jax.lax.broadcasted_iota(jnp.int32, (1, L, 1), 1)       # [1, L, 1]
    hseq = jnp.zeros((B, L, H), jnp.float32)

    # Static unroll (L = 8): straight-line code, only the recurrent matmul
    # plus gate activations per step.  PyTorch gate order: i, f, g, o.
    for t in range(L):
        g = gx[:, t, :] + jnp.dot(h, whh, preferred_element_type=jnp.float32)
        i = jax.nn.sigmoid(g[:, 0 * H:1 * H])
        f = jax.nn.sigmoid(g[:, 1 * H:2 * H])
        u = jnp.tanh(g[:, 2 * H:3 * H])
        o = jax.nn.sigmoid(g[:, 3 * H:4 * H])
        c = f * c + i * u
        h = o * jnp.tanh(c)
        hseq = jnp.where(t_sel == t, h[:, None, :], hseq)           # place h_t

    # ---- pack/pad_packed semantics: zero outputs at t >= length ----
    mask_f = mask_ref[...]                                          # [B, L]
    lengths = jnp.sum(mask_f, axis=-1, keepdims=True)               # [B, 1]
    pos = jax.lax.broadcasted_iota(jnp.int32, (B, L), 1).astype(jnp.float32)
    valid = (pos < lengths).astype(jnp.float32)                     # [B, L]
    hseq = hseq * valid[:, :, None]                                 # [B, L, H]

    q = hseq[:, L - 1, :]                                           # [B, H]

    # ---- position-aware attention (pos projections fused into one matmul) ----
    s1 = jnp.dot(hseq.reshape(B * L, H), wh_ref[...],
                 preferred_element_type=jnp.float32).reshape(B, L, A)
    s2 = jnp.dot(q, wq_ref[...], preferred_element_type=jnp.float32)  # [B, A]
    s34 = jnp.dot(p12_ref[...].reshape(B * L, P2), wso_ref[...],
                  preferred_element_type=jnp.float32).reshape(B, L, A)

    s = jnp.tanh(s1 + s34 + s2[:, None, :] + wb_ref[...].reshape(1, 1, A))
    score = jnp.sum(s * v_ref[...].reshape(1, 1, A), axis=-1) + vb_ref[...]
    score = jnp.where(mask_f > 0, score, jnp.float32(-1e30))        # finite fill

    m = jnp.max(score, axis=-1, keepdims=True)
    e = jnp.exp(score - m)
    alpha = e * pl.reciprocal(jnp.sum(e, axis=-1, keepdims=True), approx=True)

    z = jnp.sum(alpha[:, :, None] * hseq, axis=1)                   # [B, H]

    # ---- dense classifier ----
    out_ref[...] = (jnp.dot(z, wd_ref[...], preferred_element_type=jnp.float32)
                    + bd_ref[...])


# --------------------------------- forward -----------------------------------
@jax.jit
def pallas_forward(params, data):
    token = data[:, 0, :]
    pos1 = data[:, 1, :]
    pos2 = data[:, 2, :]
    mask = data[:, 3, :]

    # TODO(synk): embedding gathers stay in plain JAX glue (no Pallas gather).
    word_emb = params['word_vec'][token]              # [B, L, Dw]
    p1 = params['pos1_emb'][pos1]                     # [B, L, P]
    p2 = params['pos2_emb'][pos2]                     # [B, L, P]
    p12 = jnp.concatenate([p1, p2], axis=-1)          # [B, L, 2P] (fuses w/ gather)
    mask_f = (mask > 0).astype(jnp.float32)           # [B, L]

    wih, whh, bih, bhh = params['lstm'][0]            # single LSTM layer
    wso = jnp.concatenate([params['ws'][0], params['wo'][0]], axis=0)   # [2P, A]

    B, L, _ = word_emb.shape
    C = params['dense_w'].shape[0]

    args = (
        word_emb,                                     # [B, L, Dw]
        p12,                                          # [B, L, 2P]
        mask_f,                                       # [B, L]
        wih.T,                                        # [Dw, 4H]
        whh.T,                                        # [H, 4H]
        (bih + bhh)[None, :],                         # [1, 4H]
        params['wh'][0],                              # [H, A]
        params['wq'][0],                              # [H, A]
        wso,                                          # [2P, A]
        params['v'][0].reshape(1, -1),                # [1, A]
        params['wb'][0],                              # [1, A]
        params['vb'][0],                              # [1, 1]
        params['dense_w'].T,                          # [H, C]
        params['dense_b'][None, :],                   # [1, C]
    )

    def fs(shape):
        zeros = (0,) * len(shape)
        return pl.BlockSpec(shape, lambda i, _z=zeros: _z)

    return pl.pallas_call(
        pa_lstm_kernel,
        out_shape=jax.ShapeDtypeStruct((B, C), jnp.float32),
        grid_spec=pltpu.PrefetchScalarGridSpec(
            num_scalar_prefetch=0,
            grid=(1,),                                # single fused grid point
            in_specs=[fs(a.shape) for a in args],
            out_specs=fs((B, C)),
        ),
        compiler_params=pltpu.CompilerParams(
            dimension_semantics=("arbitrary",)),
    )(*args)


# ----------------------------- pure-JAX reference ----------------------------
def ref_forward(params, data):
    token, pos1, pos2, mask = (data[:, i, :] for i in range(4))
    word_emb = params['word_vec'][token]
    p1 = params['pos1_emb'][pos1]
    p2 = params['pos2_emb'][pos2]
    lengths = jnp.sum(mask > 0, axis=-1)

    x = word_emb
    for l in range(LAYERS):
        wih, whh, bih, bhh = params['lstm'][l]
        B, L, _ = x.shape
        h = jnp.zeros((B, HIDDEN), jnp.float32)
        c = jnp.zeros((B, HIDDEN), jnp.float32)
        outs = []
        for t in range(L):
            gates = x[:, t, :] @ wih.T + h @ whh.T + bih + bhh
            i = jax.nn.sigmoid(gates[:, :HIDDEN])
            f = jax.nn.sigmoid(gates[:, HIDDEN:2 * HIDDEN])
            g = jnp.tanh(gates[:, 2 * HIDDEN:3 * HIDDEN])
            o = jax.nn.sigmoid(gates[:, 3 * HIDDEN:])
            c = f * c + i * g
            h = o * jnp.tanh(c)
            outs.append(h)
        x = jnp.stack(outs, axis=1)

    valid = (jnp.arange(MAX_LEN)[None, :] < lengths[:, None]).astype(jnp.float32)
    hseq = x * valid[:, :, None]
    q = hseq[:, -1, :]
    s1 = hseq @ params['wh'][0]
    s2 = (q @ params['wq'][0])[:, None, :]
    s3 = p1 @ params['ws'][0]
    s4 = p2 @ params['wo'][0]
    s = jnp.tanh(s1 + s2 + s3 + s4 + params['wb'][0])
    score = (s @ params['v'][0])[:, :, 0] + params['vb'][0, 0, 0]
    score = jnp.where(mask > 0, score, -jnp.inf)
    alpha = jax.nn.softmax(score, axis=-1)
    z = jnp.einsum('bl,blh->bh', alpha, hseq)
    return z @ params['dense_w'].T + params['dense_b']


# ------------------------------- init & main ----------------------------------
def init_params(key):
    ks = jax.random.split(key, 10)
    params = {}
    params['word_vec'] = jax.random.normal(ks[0], (VOCAB, WORD_DIM), jnp.float32)
    params['pos1_emb'] = jax.random.uniform(ks[1], (2 * MAX_LEN - 1, POS_DIM),
                                            jnp.float32, -1.0, 1.0)
    params['pos2_emb'] = jax.random.uniform(ks[2], (2 * MAX_LEN - 1, POS_DIM),
                                            jnp.float32, -1.0, 1.0)
    k = 1.0 / np.sqrt(HIDDEN)
    lstm_params = []
    kk = jax.random.split(ks[3], LAYERS * 4)
    for l in range(LAYERS):
        din = WORD_DIM if l == 0 else HIDDEN
        wih = jax.random.uniform(kk[4 * l + 0], (4 * HIDDEN, din), jnp.float32, -k, k)
        whh = jax.random.uniform(kk[4 * l + 1], (4 * HIDDEN, HIDDEN), jnp.float32, -k, k)
        bih = jax.random.uniform(kk[4 * l + 2], (4 * HIDDEN,), jnp.float32, -k, k)
        bhh = jax.random.uniform(kk[4 * l + 3], (4 * HIDDEN,), jnp.float32, -k, k)
        lstm_params.append((wih, whh, bih, bhh))
    params['lstm'] = lstm_params
    params['wh'] = 0.001 * jax.random.normal(ks[4], (1, HIDDEN, ATT_LEN), jnp.float32)
    params['wq'] = 0.001 * jax.random.normal(ks[5], (1, HIDDEN, ATT_LEN), jnp.float32)
    params['ws'] = 0.001 * jax.random.normal(ks[6], (1, POS_DIM, ATT_LEN), jnp.float32)
    params['wo'] = 0.001 * jax.random.normal(ks[7], (1, POS_DIM, ATT_LEN), jnp.float32)
    params['v'] = jax.random.normal(ks[8], (1, ATT_LEN, 1), jnp.float32)
    params['wb'] = jnp.zeros((1, 1, ATT_LEN), jnp.float32)
    params['vb'] = jnp.zeros((1, 1, 1), jnp.float32)
    lim = float(np.sqrt(6.0 / (CLASS_NUM + HIDDEN)))
    params['dense_w'] = jax.random.uniform(ks[9], (CLASS_NUM, HIDDEN),
                                           jnp.float32, -lim, lim)
    params['dense_b'] = jnp.zeros((CLASS_NUM,), jnp.float32)
    return params


if __name__ == "__main__":
    params = init_params(jax.random.PRNGKey(0))

    dk = jax.random.split(jax.random.PRNGKey(0), 3)
    lengths = np.array([MAX_LEN, 5], dtype=np.int32)          # B = 2
    token = jax.random.randint(dk[0], (BATCH, MAX_LEN), 2, VOCAB, jnp.int32)
    pos1 = jax.random.randint(dk[1], (BATCH, MAX_LEN), 0, 2 * MAX_LEN - 1, jnp.int32)
    pos2 = jax.random.randint(dk[2], (BATCH, MAX_LEN), 0, 2 * MAX_LEN - 1, jnp.int32)
    mask = jnp.asarray((np.arange(MAX_LEN)[None, :] < lengths[:, None]).astype(np.int32))
    data = jnp.stack([token, pos1, pos2, mask], axis=1)        # [B, 4, L] int32

    logits = pallas_forward(params, data)
    logits = jax.block_until_ready(logits)

    ref = jax.block_until_ready(ref_forward(params, data))
    np.testing.assert_allclose(np.asarray(logits), np.asarray(ref),
                               rtol=5e-3, atol=5e-3)
    assert logits.shape == (BATCH, CLASS_NUM)
    print("KERNEL_OK")
</pallas_src>

<mosaic_0001>
module attributes {stable_mosaic.version = 11 : i64} {
  func.func @pa_lstm_kernel(%arg0: i32, %arg1: memref<2x8x32xf32, #tpu.memory_space<vmem>>, %arg2: memref<2x8x16xf32, #tpu.memory_space<vmem>>, %arg3: memref<2x8xf32, #tpu.memory_space<vmem>>, %arg4: memref<32x128xf32, #tpu.memory_space<vmem>>, %arg5: memref<32x128xf32, #tpu.memory_space<vmem>>, %arg6: memref<1x128xf32, #tpu.memory_space<vmem>>, %arg7: memref<32x16xf32, #tpu.memory_space<vmem>>, %arg8: memref<32x16xf32, #tpu.memory_space<vmem>>, %arg9: memref<16x16xf32, #tpu.memory_space<vmem>>, %arg10: memref<1x16xf32, #tpu.memory_space<vmem>>, %arg11: memref<1x16xf32, #tpu.memory_space<vmem>>, %arg12: memref<1x1xf32, #tpu.memory_space<vmem>>, %arg13: memref<32x5xf32, #tpu.memory_space<vmem>>, %arg14: memref<1x5xf32, #tpu.memory_space<vmem>>, %arg15: memref<2x5xf32, #tpu.memory_space<vmem>>) attributes {dimension_semantics = [#tpu.dimension_semantics<arbitrary>], iteration_bounds = array<i64: 1>, scalar_prefetch = 0 : i64, scratch_operands = 0 : i64, tpu.core_type = #tpu.core_type<tc>, window_params = [{pipeline_mode = #tpu.pipeline_mode<synchronous>, transform_indices = @transform_0, window_bounds = array<i64: 2, 8, 32>}, {pipeline_mode = #tpu.pipeline_mode<synchronous>, transform_indices = @transform_1, window_bounds = array<i64: 2, 8, 16>}, {pipeline_mode = #tpu.pipeline_mode<synchronous>, transform_indices = @transform_2, window_bounds = array<i64: 2, 8>}, {pipeline_mode = #tpu.pipeline_mode<synchronous>, transform_indices = @transform_3, window_bounds = array<i64: 32, 128>}, {pipeline_mode = #tpu.pipeline_mode<synchronous>, transform_indices = @transform_4, window_bounds = array<i64: 32, 128>}, {pipeline_mode = #tpu.pipeline_mode<synchronous>, transform_indices = @transform_5, window_bounds = array<i64: 1, 128>}, {pipeline_mode = #tpu.pipeline_mode<synchronous>, transform_indices = @transform_6, window_bounds = array<i64: 32, 16>}, {pipeline_mode = #tpu.pipeline_mode<synchronous>, transform_indices = @transform_7, window_bounds = array<i64: 32, 16>}, {pipeline_mode = #tpu.pipeline_mode<synchronous>, transform_indices = @transform_8, window_bounds = array<i64: 16, 16>}, {pipeline_mode = #tpu.pipeline_mode<synchronous>, transform_indices = @transform_9, window_bounds = array<i64: 1, 16>}, {pipeline_mode = #tpu.pipeline_mode<synchronous>, transform_indices = @transform_10, window_bounds = array<i64: 1, 16>}, {pipeline_mode = #tpu.pipeline_mode<synchronous>, transform_indices = @transform_11, window_bounds = array<i64: 1, 1>}, {pipeline_mode = #tpu.pipeline_mode<synchronous>, transform_indices = @transform_12, window_bounds = array<i64: 32, 5>}, {pipeline_mode = #tpu.pipeline_mode<synchronous>, transform_indices = @transform_13, window_bounds = array<i64: 1, 5>}, {pipeline_mode = #tpu.pipeline_mode<synchronous>, transform_indices = @transform_14, window_bounds = array<i64: 2, 5>}]} {
    %c0 = arith.constant 0 : index
    %c0_0 = arith.constant 0 : index
    %c0_1 = arith.constant 0 : index
    %0 = vector.load %arg1[%c0, %c0_0, %c0_1] : memref<2x8x32xf32, #tpu.memory_space<vmem>>, vector<2x8x32xf32>
    %1 = vector.shape_cast %0 : vector<2x8x32xf32> to vector<16x32xf32>
    %c0_2 = arith.constant 0 : index
    %c0_3 = arith.constant 0 : index
    %2 = vector.load %arg4[%c0_2, %c0_3] : memref<32x128xf32, #tpu.memory_space<vmem>>, vector<32x128xf32>
    %cst = arith.constant dense<0.000000e+00> : vector<16x128xf32>
    %3 = tpu.matmul %1, %2, %cst {dimension_numbers = #tpu.dot_dimension_numbers<[1], [0], [0], [1], [0, 0, 1, 1], [], []>} : vector<16x32xf32>, vector<32x128xf32>, vector<16x128xf32> -> vector<16x128xf32>
    %c0_4 = arith.constant 0 : index
    %c0_5 = arith.constant 0 : index
    %4 = vector.load %arg6[%c0_4, %c0_5] : memref<1x128xf32, #tpu.memory_space<vmem>>, vector<1x128xf32>
    %5 = vector.broadcast %4 : vector<1x128xf32> to vector<16x128xf32>
    %6 = arith.addf %3, %5 : vector<16x128xf32>
    %7 = vector.shape_cast %6 : vector<16x128xf32> to vector<2x8x128xf32>
    %c0_6 = arith.constant 0 : index
    %c0_7 = arith.constant 0 : index
    %8 = vector.load %arg5[%c0_6, %c0_7] : memref<32x128xf32, #tpu.memory_space<vmem>>, vector<32x128xf32>
    %cst_8 = arith.constant 0.000000e+00 : f32
    %9 = vector.broadcast %cst_8 : f32 to vector<2x32xf32>
    %cst_9 = arith.constant 0.000000e+00 : f32
    %10 = vector.broadcast %cst_9 : f32 to vector<2x32xf32>
    %11 = tpu.iota {dimensions = array<i32: 1>} : vector<1x8x1xi32>
    %cst_10 = arith.constant 0.000000e+00 : f32
    %12 = vector.broadcast %cst_10 : f32 to vector<2x8x32xf32>
    %13 = vector.extract_strided_slice %7 {offsets = [0, 0, 0], sizes = [2, 1, 128], strides = [1, 1, 1]} : vector<2x8x128xf32> to vector<2x1x128xf32>
    %14 = vector.shape_cast %13 : vector<2x1x128xf32> to vector<2x128xf32>
    %cst_11 = arith.constant dense<0.000000e+00> : vector<2x128xf32>
    %15 = tpu.matmul %9, %8, %cst_11 {dimension_numbers = #tpu.dot_dimension_numbers<[1], [0], [0], [1], [0, 0, 1, 1], [], []>} : vector<2x32xf32>, vector<32x128xf32>, vector<2x128xf32> -> vector<2x128xf32>
    %16 = arith.addf %14, %15 : vector<2x128xf32>
    %17 = vector.extract_strided_slice %16 {offsets = [0, 0], sizes = [2, 32], strides = [1, 1]} : vector<2x128xf32> to vector<2x32xf32>
    %18 = arith.negf %17 : vector<2x32xf32>
    %19 = math.exp %18 : vector<2x32xf32>
    %cst_12 = arith.constant 1.000000e+00 : f32
    %20 = vector.broadcast %cst_12 : f32 to vector<2x32xf32>
    %21 = arith.addf %20, %19 : vector<2x32xf32>
    %22 = arith.divf %20, %21 : vector<2x32xf32>
    %23 = vector.extract_strided_slice %16 {offsets = [0, 32], sizes = [2, 32], strides = [1, 1]} : vector<2x128xf32> to vector<2x32xf32>
    %24 = arith.negf %23 : vector<2x32xf32>
    %25 = math.exp %24 : vector<2x32xf32>
    %cst_13 = arith.constant 1.000000e+00 : f32
    %26 = vector.broadcast %cst_13 : f32 to vector<2x32xf32>
    %27 = arith.addf %26, %25 : vector<2x32xf32>
    %28 = arith.divf %26, %27 : vector<2x32xf32>
    %29 = vector.extract_strided_slice %16 {offsets = [0, 64], sizes = [2, 32], strides = [1, 1]} : vector<2x128xf32> to vector<2x32xf32>
    %30 = math.tanh %29 : vector<2x32xf32>
    %31 = vector.extract_strided_slice %16 {offsets = [0, 96], sizes = [2, 32], strides = [1, 1]} : vector<2x128xf32> to vector<2x32xf32>
    %32 = arith.negf %31 : vector<2x32xf32>
    %33 = math.exp %32 : vector<2x32xf32>
    %cst_14 = arith.constant 1.000000e+00 : f32
    %34 = vector.broadcast %cst_14 : f32 to vector<2x32xf32>
    %35 = arith.addf %34, %33 : vector<2x32xf32>
    %36 = arith.divf %34, %35 : vector<2x32xf32>
    %37 = arith.mulf %28, %10 : vector<2x32xf32>
    %38 = arith.mulf %22, %30 : vector<2x32xf32>
    %39 = arith.addf %37, %38 : vector<2x32xf32>
    %40 = math.tanh %39 : vector<2x32xf32>
    %41 = arith.mulf %36, %40 : vector<2x32xf32>
    %c0_i32 = arith.constant 0 : i32
    %42 = vector.broadcast %c0_i32 : i32 to vector<1x8x1xi32>
    %43 = arith.cmpi eq, %11, %42 : vector<1x8x1xi32>
    %44 = vector.shape_cast %41 : vector<2x32xf32> to vector<2x1x32xf32>
    %45 = vector.shape_cast %43 : vector<1x8x1xi1> to vector<1x8x1xi1>
    %46 = vector.broadcast %45 : vector<1x8x1xi1> to vector<2x8x32xi1>
    %47 = vector.shape_cast %44 : vector<2x1x32xf32> to vector<2x1x32xf32>
    %48 = vector.broadcast %47 : vector<2x1x32xf32> to vector<2x8x32xf32>
    %49 = arith.select %46, %48, %12 : vector<2x8x32xi1>, vector<2x8x32xf32>
    %50 = vector.extract_strided_slice %7 {offsets = [0, 1, 0], sizes = [2, 1, 128], strides = [1, 1, 1]} : vector<2x8x128xf32> to vector<2x1x128xf32>
    %51 = vector.shape_cast %50 : vector<2x1x128xf32> to vector<2x128xf32>
    %cst_15 = arith.constant dense<0.000000e+00> : vector<2x128xf32>
    %52 = tpu.matmul %41, %8, %cst_15 {dimension_numbers = #tpu.dot_dimension_numbers<[1], [0], [0], [1], [0, 0, 1, 1], [], []>} : vector<2x32xf32>, vector<32x128xf32>, vector<2x128xf32> -> vector<2x128xf32>
    %53 = arith.addf %51, %52 : vector<2x128xf32>
    %54 = vector.extract_strided_slice %53 {offsets = [0, 0], sizes = [2, 32], strides = [1, 1]} : vector<2x128xf32> to vector<2x32xf32>
    %55 = arith.negf %54 : vector<2x32xf32>
    %56 = math.exp %55 : vector<2x32xf32>
    %cst_16 = arith.constant 1.000000e+00 : f32
    %57 = vector.broadcast %cst_16 : f32 to vector<2x32xf32>
    %58 = arith.addf %57, %56 : vector<2x32xf32>
    %59 = arith.divf %57, %58 : vector<2x32xf32>
    %60 = vector.extract_strided_slice %53 {offsets = [0, 32], sizes = [2, 32], strides = [1, 1]} : vector<2x128xf32> to vector<2x32xf32>
    %61 = arith.negf %60 : vector<2x32xf32>
    %62 = math.exp %61 : vector<2x32xf32>
    %cst_17 = arith.constant 1.000000e+00 : f32
    %63 = vector.broadcast %cst_17 : f32 to vector<2x32xf32>
    %64 = arith.addf %63, %62 : vector<2x32xf32>
    %65 = arith.divf %63, %64 : vector<2x32xf32>
    %66 = vector.extract_strided_slice %53 {offsets = [0, 64], sizes = [2, 32], strides = [1, 1]} : vector<2x128xf32> to vector<2x32xf32>
    %67 = math.tanh %66 : vector<2x32xf32>
    %68 = vector.extract_strided_slice %53 {offsets = [0, 96], sizes = [2, 32], strides = [1, 1]} : vector<2x128xf32> to vector<2x32xf32>
    %69 = arith.negf %68 : vector<2x32xf32>
    %70 = math.exp %69 : vector<2x32xf32>
    %cst_18 = arith.constant 1.000000e+00 : f32
    %71 = vector.broadcast %cst_18 : f32 to vector<2x32xf32>
    %72 = arith.addf %71, %70 : vector<2x32xf32>
    %73 = arith.divf %71, %72 : vector<2x32xf32>
    %74 = arith.mulf %65, %39 : vector<2x32xf32>
    %75 = arith.mulf %59, %67 : vector<2x32xf32>
    %76 = arith.addf %74, %75 : vector<2x32xf32>
    %77 = math.tanh %76 : vector<2x32xf32>
    %78 = arith.mulf %73, %77 : vector<2x32xf32>
    %c1_i32 = arith.constant 1 : i32
    %79 = vector.broadcast %c1_i32 : i32 to vector<1x8x1xi32>
    %80 = arith.cmpi eq, %11, %79 : vector<1x8x1xi32>
    %81 = vector.shape_cast %78 : vector<2x32xf32> to vector<2x1x32xf32>
    %82 = vector.shape_cast %80 : vector<1x8x1xi1> to vector<1x8x1xi1>
    %83 = vector.broadcast %82 : vector<1x8x1xi1> to vector<2x8x32xi1>
    %84 = vector.shape_cast %81 : vector<2x1x32xf32> to vector<2x1x32xf32>
    %85 = vector.broadcast %84 : vector<2x1x32xf32> to vector<2x8x32xf32>
    %86 = arith.select %83, %85, %49 : vector<2x8x32xi1>, vector<2x8x32xf32>
    %87 = vector.extract_strided_slice %7 {offsets = [0, 2, 0], sizes = [2, 1, 128], strides = [1, 1, 1]} : vector<2x8x128xf32> to vector<2x1x128xf32>
    %88 = vector.shape_cast %87 : vector<2x1x128xf32> to vector<2x128xf32>
    %cst_19 = arith.constant dense<0.000000e+00> : vector<2x128xf32>
    %89 = tpu.matmul %78, %8, %cst_19 {dimension_numbers = #tpu.dot_dimension_numbers<[1], [0], [0], [1], [0, 0, 1, 1], [], []>} : vector<2x32xf32>, vector<32x128xf32>, vector<2x128xf32> -> vector<2x128xf32>
    %90 = arith.addf %88, %89 : vector<2x128xf32>
    %91 = vector.extract_strided_slice %90 {offsets = [0, 0], sizes = [2, 32], strides = [1, 1]} : vector<2x128xf32> to vector<2x32xf32>
    %92 = arith.negf %91 : vector<2x32xf32>
    %93 = math.exp %92 : vector<2x32xf32>
    %cst_20 = arith.constant 1.000000e+00 : f32
    %94 = vector.broadcast %cst_20 : f32 to vector<2x32xf32>
    %95 = arith.addf %94, %93 : vector<2x32xf32>
    %96 = arith.divf %94, %95 : vector<2x32xf32>
    %97 = vector.extract_strided_slice %90 {offsets = [0, 32], sizes = [2, 32], strides = [1, 1]} : vector<2x128xf32> to vector<2x32xf32>
    %98 = arith.negf %97 : vector<2x32xf32>
    %99 = math.exp %98 : vector<2x32xf32>
    %cst_21 = arith.constant 1.000000e+00 : f32
    %100 = vector.broadcast %cst_21 : f32 to vector<2x32xf32>
    %101 = arith.addf %100, %99 : vector<2x32xf32>
    %102 = arith.divf %100, %101 : vector<2x32xf32>
    %103 = vector.extract_strided_slice %90 {offsets = [0, 64], sizes = [2, 32], strides = [1, 1]} : vector<2x128xf32> to vector<2x32xf32>
    %104 = math.tanh %103 : vector<2x32xf32>
    %105 = vector.extract_strided_slice %90 {offsets = [0, 96], sizes = [2, 32], strides = [1, 1]} : vector<2x128xf32> to vector<2x32xf32>
    %106 = arith.negf %105 : vector<2x32xf32>
    %107 = math.exp %106 : vector<2x32xf32>
    %cst_22 = arith.constant 1.000000e+00 : f32
    %108 = vector.broadcast %cst_22 : f32 to vector<2x32xf32>
    %109 = arith.addf %108, %107 : vector<2x32xf32>
    %110 = arith.divf %108, %109 : vector<2x32xf32>
    %111 = arith.mulf %102, %76 : vector<2x32xf32>
    %112 = arith.mulf %96, %104 : vector<2x32xf32>
    %113 = arith.addf %111, %112 : vector<2x32xf32>
    %114 = math.tanh %113 : vector<2x32xf32>
    %115 = arith.mulf %110, %114 : vector<2x32xf32>
    %c2_i32 = arith.constant 2 : i32
    %116 = vector.broadcast %c2_i32 : i32 to vector<1x8x1xi32>
    %117 = arith.cmpi eq, %11, %116 : vector<1x8x1xi32>
    %118 = vector.shape_cast %115 : vector<2x32xf32> to vector<2x1x32xf32>
    %119 = vector.shape_cast %117 : vector<1x8x1xi1> to vector<1x8x1xi1>
    %120 = vector.broadcast %119 : vector<1x8x1xi1> to vector<2x8x32xi1>
    %121 = vector.shape_cast %118 : vector<2x1x32xf32> to vector<2x1x32xf32>
    %122 = vector.broadcast %121 : vector<2x1x32xf32> to vector<2x8x32xf32>
    %123 = arith.select %120, %122, %86 : vector<2x8x32xi1>, vector<2x8x32xf32>
    %124 = vector.extract_strided_slice %7 {offsets = [0, 3, 0], sizes = [2, 1, 128], strides = [1, 1, 1]} : vector<2x8x128xf32> to vector<2x1x128xf32>
    %125 = vector.shape_cast %124 : vector<2x1x128xf32> to vector<2x128xf32>
    %cst_23 = arith.constant dense<0.000000e+00> : vector<2x128xf32>
    %126 = tpu.matmul %115, %8, %cst_23 {dimension_numbers = #tpu.dot_dimension_numbers<[1], [0], [0], [1], [0, 0, 1, 1], [], []>} : vector<2x32xf32>, vector<32x128xf32>, vector<2x128xf32> -> vector<2x128xf32>
    %127 = arith.addf %125, %126 : vector<2x128xf32>
    %128 = vector.extract_strided_slice %127 {offsets = [0, 0], sizes = [2, 32], strides = [1, 1]} : vector<2x128xf32> to vector<2x32xf32>
    %129 = arith.negf %128 : vector<2x32xf32>
    %130 = math.exp %129 : vector<2x32xf32>
    %cst_24 = arith.constant 1.000000e+00 : f32
    %131 = vector.broadcast %cst_24 : f32 to vector<2x32xf32>
    %132 = arith.addf %131, %130 : vector<2x32xf32>
    %133 = arith.divf %131, %132 : vector<2x32xf32>
    %134 = vector.extract_strided_slice %127 {offsets = [0, 32], sizes = [2, 32], strides = [1, 1]} : vector<2x128xf32> to vector<2x32xf32>
    %135 = arith.negf %134 : vector<2x32xf32>
    %136 = math.exp %135 : vector<2x32xf32>
    %cst_25 = arith.constant 1.000000e+00 : f32
    %137 = vector.broadcast %cst_25 : f32 to vector<2x32xf32>
    %138 = arith.addf %137, %136 : vector<2x32xf32>
    %139 = arith.divf %137, %138 : vector<2x32xf32>
    %140 = vector.extract_strided_slice %127 {offsets = [0, 64], sizes = [2, 32], strides = [1, 1]} : vector<2x128xf32> to vector<2x32xf32>
    %141 = math.tanh %140 : vector<2x32xf32>
    %142 = vector.extract_strided_slice %127 {offsets = [0, 96], sizes = [2, 32], strides = [1, 1]} : vector<2x128xf32> to vector<2x32xf32>
    %143 = arith.negf %142 : vector<2x32xf32>
    %144 = math.exp %143 : vector<2x32xf32>
    %cst_26 = arith.constant 1.000000e+00 : f32
    %145 = vector.broadcast %cst_26 : f32 to vector<2x32xf32>
    %146 = arith.addf %145, %144 : vector<2x32xf32>
    %147 = arith.divf %145, %146 : vector<2x32xf32>
    %148 = arith.mulf %139, %113 : vector<2x32xf32>
    %149 = arith.mulf %133, %141 : vector<2x32xf32>
    %150 = arith.addf %148, %149 : vector<2x32xf32>
    %151 = math.tanh %150 : vector<2x32xf32>
    %152 = arith.mulf %147, %151 : vector<2x32xf32>
    %c3_i32 = arith.constant 3 : i32
    %153 = vector.broadcast %c3_i32 : i32 to vector<1x8x1xi32>
    %154 = arith.cmpi eq, %11, %153 : vector<1x8x1xi32>
    %155 = vector.shape_cast %152 : vector<2x32xf32> to vector<2x1x32xf32>
    %156 = vector.shape_cast %154 : vector<1x8x1xi1> to vector<1x8x1xi1>
    %157 = vector.broadcast %156 : vector<1x8x1xi1> to vector<2x8x32xi1>
    %158 = vector.shape_cast %155 : vector<2x1x32xf32> to vector<2x1x32xf32>
    %159 = vector.broadcast %158 : vector<2x1x32xf32> to vector<2x8x32xf32>
    %160 = arith.select %157, %159, %123 : vector<2x8x32xi1>, vector<2x8x32xf32>
    %161 = vector.extract_strided_slice %7 {offsets = [0, 4, 0], sizes = [2, 1, 128], strides = [1, 1, 1]} : vector<2x8x128xf32> to vector<2x1x128xf32>
    %162 = vector.shape_cast %161 : vector<2x1x128xf32> to vector<2x128xf32>
    %cst_27 = arith.constant dense<0.000000e+00> : vector<2x128xf32>
    %163 = tpu.matmul %152, %8, %cst_27 {dimension_numbers = #tpu.dot_dimension_numbers<[1], [0], [0], [1], [0, 0, 1, 1], [], []>} : vector<2x32xf32>, vector<32x128xf32>, vector<2x128xf32> -> vector<2x128xf32>
    %164 = arith.addf %162, %163 : vector<2x128xf32>
    %165 = vector.extract_strided_slice %164 {offsets = [0, 0], sizes = [2, 32], strides = [1, 1]} : vector<2x128xf32> to vector<2x32xf32>
    %166 = arith.negf %165 : vector<2x32xf32>
    %167 = math.exp %166 : vector<2x32xf32>
    %cst_28 = arith.constant 1.000000e+00 : f32
    %168 = vector.broadcast %cst_28 : f32 to vector<2x32xf32>
    %169 = arith.addf %168, %167 : vector<2x32xf32>
    %170 = arith.divf %168, %169 : vector<2x32xf32>
    %171 = vector.extract_strided_slice %164 {offsets = [0, 32], sizes = [2, 32], strides = [1, 1]} : vector<2x128xf32> to vector<2x32xf32>
    %172 = arith.negf %171 : vector<2x32xf32>
    %173 = math.exp %172 : vector<2x32xf32>
    %cst_29 = arith.constant 1.000000e+00 : f32
    %174 = vector.broadcast %cst_29 : f32 to vector<2x32xf32>
    %175 = arith.addf %174, %173 : vector<2x32xf32>
    %176 = arith.divf %174, %175 : vector<2x32xf32>
    %177 = vector.extract_strided_slice %164 {offsets = [0, 64], sizes = [2, 32], strides = [1, 1]} : vector<2x128xf32> to vector<2x32xf32>
    %178 = math.tanh %177 : vector<2x32xf32>
    %179 = vector.extract_strided_slice %164 {offsets = [0, 96], sizes = [2, 32], strides = [1, 1]} : vector<2x128xf32> to vector<2x32xf32>
    %180 = arith.negf %179 : vector<2x32xf32>
    %181 = math.exp %180 : vector<2x32xf32>
    %cst_30 = arith.constant 1.000000e+00 : f32
    %182 = vector.broadcast %cst_30 : f32 to vector<2x32xf32>
    %183 = arith.addf %182, %181 : vector<2x32xf32>
    %184 = arith.divf %182, %183 : vector<2x32xf32>
    %185 = arith.mulf %176, %150 : vector<2x32xf32>
    %186 = arith.mulf %170, %178 : vector<2x32xf32>
    %187 = arith.addf %185, %186 : vector<2x32xf32>
    %188 = math.tanh %187 : vector<2x32xf32>
    %189 = arith.mulf %184, %188 : vector<2x32xf32>
    %c4_i32 = arith.constant 4 : i32
    %190 = vector.broadcast %c4_i32 : i32 to vector<1x8x1xi32>
    %191 = arith.cmpi eq, %11, %190 : vector<1x8x1xi32>
    %192 = vector.shape_cast %189 : vector<2x32xf32> to vector<2x1x32xf32>
    %193 = vector.shape_cast %191 : vector<1x8x1xi1> to vector<1x8x1xi1>
    %194 = vector.broadcast %193 : vector<1x8x1xi1> to vector<2x8x32xi1>
    %195 = vector.shape_cast %192 : vector<2x1x32xf32> to vector<2x1x32xf32>
    %196 = vector.broadcast %195 : vector<2x1x32xf32> to vector<2x8x32xf32>
    %197 = arith.select %194, %196, %160 : vector<2x8x32xi1>, vector<2x8x32xf32>
    %198 = vector.extract_strided_slice %7 {offsets = [0, 5, 0], sizes = [2, 1, 128], strides = [1, 1, 1]} : vector<2x8x128xf32> to vector<2x1x128xf32>
    %199 = vector.shape_cast %198 : vector<2x1x128xf32> to vector<2x128xf32>
    %cst_31 = arith.constant dense<0.000000e+00> : vector<2x128xf32>
    %200 = tpu.matmul %189, %8, %cst_31 {dimension_numbers = #tpu.dot_dimension_numbers<[1], [0], [0], [1], [0, 0, 1, 1], [], []>} : vector<2x32xf32>, vector<32x128xf32>, vector<2x128xf32> -> vector<2x128xf32>
    %201 = arith.addf %199, %200 : vector<2x128xf32>
    %202 = vector.extract_strided_slice %201 {offsets = [0, 0], sizes = [2, 32], strides = [1, 1]} : vector<2x128xf32> to vector<2x32xf32>
    %203 = arith.negf %202 : vector<2x32xf32>
    %204 = math.exp %203 : vector<2x32xf32>
    %cst_32 = arith.constant 1.000000e+00 : f32
    %205 = vector.broadcast %cst_32 : f32 to vector<2x32xf32>
    %206 = arith.addf %205, %204 : vector<2x32xf32>
    %207 = arith.divf %205, %206 : vector<2x32xf32>
    %208 = vector.extract_strided_slice %201 {offsets = [0, 32], sizes = [2, 32], strides = [1, 1]} : vector<2x128xf32> to vector<2x32xf32>
    %209 = arith.negf %208 : vector<2x32xf32>
    %210 = math.exp %209 : vector<2x32xf32>
    %cst_33 = arith.constant 1.000000e+00 : f32
    %211 = vector.broadcast %cst_33 : f32 to vector<2x32xf32>
    %212 = arith.addf %211, %210 : vector<2x32xf32>
    %213 = arith.divf %211, %212 : vector<2x32xf32>
    %214 = vector.extract_strided_slice %201 {offsets = [0, 64], sizes = [2, 32], strides = [1, 1]} : vector<2x128xf32> to vector<2x32xf32>
    %215 = math.tanh %214 : vector<2x32xf32>
    %216 = vector.extract_strided_slice %201 {offsets = [0, 96], sizes = [2, 32], strides = [1, 1]} : vector<2x128xf32> to vector<2x32xf32>
    %217 = arith.negf %216 : vector<2x32xf32>
    %218 = math.exp %217 : vector<2x32xf32>
    %cst_34 = arith.constant 1.000000e+00 : f32
    %219 = vector.broadcast %cst_34 : f32 to vector<2x32xf32>
    %220 = arith.addf %219, %218 : vector<2x32xf32>
    %221 = arith.divf %219, %220 : vector<2x32xf32>
    %222 = arith.mulf %213, %187 : vector<2x32xf32>
    %223 = arith.mulf %207, %215 : vector<2x32xf32>
    %224 = arith.addf %222, %223 : vector<2x32xf32>
    %225 = math.tanh %224 : vector<2x32xf32>
    %226 = arith.mulf %221, %225 : vector<2x32xf32>
    %c5_i32 = arith.constant 5 : i32
    %227 = vector.broadcast %c5_i32 : i32 to vector<1x8x1xi32>
    %228 = arith.cmpi eq, %11, %227 : vector<1x8x1xi32>
    %229 = vector.shape_cast %226 : vector<2x32xf32> to vector<2x1x32xf32>
    %230 = vector.shape_cast %228 : vector<1x8x1xi1> to vector<1x8x1xi1>
    %231 = vector.broadcast %230 : vector<1x8x1xi1> to vector<2x8x32xi1>
    %232 = vector.shape_cast %229 : vector<2x1x32xf32> to vector<2x1x32xf32>
    %233 = vector.broadcast %232 : vector<2x1x32xf32> to vector<2x8x32xf32>
    %234 = arith.select %231, %233, %197 : vector<2x8x32xi1>, vector<2x8x32xf32>
    %235 = vector.extract_strided_slice %7 {offsets = [0, 6, 0], sizes = [2, 1, 128], strides = [1, 1, 1]} : vector<2x8x128xf32> to vector<2x1x128xf32>
    %236 = vector.shape_cast %235 : vector<2x1x128xf32> to vector<2x128xf32>
    %cst_35 = arith.constant dense<0.000000e+00> : vector<2x128xf32>
    %237 = tpu.matmul %226, %8, %cst_35 {dimension_numbers = #tpu.dot_dimension_numbers<[1], [0], [0], [1], [0, 0, 1, 1], [], []>} : vector<2x32xf32>, vector<32x128xf32>, vector<2x128xf32> -> vector<2x128xf32>
    %238 = arith.addf %236, %237 : vector<2x128xf32>
    %239 = vector.extract_strided_slice %238 {offsets = [0, 0], sizes = [2, 32], strides = [1, 1]} : vector<2x128xf32> to vector<2x32xf32>
    %240 = arith.negf %239 : vector<2x32xf32>
    %241 = math.exp %240 : vector<2x32xf32>
    %cst_36 = arith.constant 1.000000e+00 : f32
    %242 = vector.broadcast %cst_36 : f32 to vector<2x32xf32>
    %243 = arith.addf %242, %241 : vector<2x32xf32>
    %244 = arith.divf %242, %243 : vector<2x32xf32>
    %245 = vector.extract_strided_slice %238 {offsets = [0, 32], sizes = [2, 32], strides = [1, 1]} : vector<2x128xf32> to vector<2x32xf32>
    %246 = arith.negf %245 : vector<2x32xf32>
    %247 = math.exp %246 : vector<2x32xf32>
    %cst_37 = arith.constant 1.000000e+00 : f32
    %248 = vector.broadcast %cst_37 : f32 to vector<2x32xf32>
    %249 = arith.addf %248, %247 : vector<2x32xf32>
    %250 = arith.divf %248, %249 : vector<2x32xf32>
    %251 = vector.extract_strided_slice %238 {offsets = [0, 64], sizes = [2, 32], strides = [1, 1]} : vector<2x128xf32> to vector<2x32xf32>
    %252 = math.tanh %251 : vector<2x32xf32>
    %253 = vector.extract_strided_slice %238 {offsets = [0, 96], sizes = [2, 32], strides = [1, 1]} : vector<2x128xf32> to vector<2x32xf32>
    %254 = arith.negf %253 : vector<2x32xf32>
    %255 = math.exp %254 : vector<2x32xf32>
    %cst_38 = arith.constant 1.000000e+00 : f32
    %256 = vector.broadcast %cst_38 : f32 to vector<2x32xf32>
    %257 = arith.addf %256, %255 : vector<2x32xf32>
    %258 = arith.divf %256, %257 : vector<2x32xf32>
    %259 = arith.mulf %250, %224 : vector<2x32xf32>
    %260 = arith.mulf %244, %252 : vector<2x32xf32>
    %261 = arith.addf %259, %260 : vector<2x32xf32>
    %262 = math.tanh %261 : vector<2x32xf32>
    %263 = arith.mulf %258, %262 : vector<2x32xf32>
    %c6_i32 = arith.constant 6 : i32
    %264 = vector.broadcast %c6_i32 : i32 to vector<1x8x1xi32>
    %265 = arith.cmpi eq, %11, %264 : vector<1x8x1xi32>
    %266 = vector.shape_cast %263 : vector<2x32xf32> to vector<2x1x32xf32>
    %267 = vector.shape_cast %265 : vector<1x8x1xi1> to vector<1x8x1xi1>
    %268 = vector.broadcast %267 : vector<1x8x1xi1> to vector<2x8x32xi1>
    %269 = vector.shape_cast %266 : vector<2x1x32xf32> to vector<2x1x32xf32>
    %270 = vector.broadcast %269 : vector<2x1x32xf32> to vector<2x8x32xf32>
    %271 = arith.select %268, %270, %234 : vector<2x8x32xi1>, vector<2x8x32xf32>
    %272 = vector.extract_strided_slice %7 {offsets = [0, 7, 0], sizes = [2, 1, 128], strides = [1, 1, 1]} : vector<2x8x128xf32> to vector<2x1x128xf32>
    %273 = vector.shape_cast %272 : vector<2x1x128xf32> to vector<2x128xf32>
    %cst_39 = arith.constant dense<0.000000e+00> : vector<2x128xf32>
    %274 = tpu.matmul %263, %8, %cst_39 {dimension_numbers = #tpu.dot_dimension_numbers<[1], [0], [0], [1], [0, 0, 1, 1], [], []>} : vector<2x32xf32>, vector<32x128xf32>, vector<2x128xf32> -> vector<2x128xf32>
    %275 = arith.addf %273, %274 : vector<2x128xf32>
    %276 = vector.extract_strided_slice %275 {offsets = [0, 0], sizes = [2, 32], strides = [1, 1]} : vector<2x128xf32> to vector<2x32xf32>
    %277 = arith.negf %276 : vector<2x32xf32>
    %278 = math.exp %277 : vector<2x32xf32>
    %cst_40 = arith.constant 1.000000e+00 : f32
    %279 = vector.broadcast %cst_40 : f32 to vector<2x32xf32>
    %280 = arith.addf %279, %278 : vector<2x32xf32>
    %281 = arith.divf %279, %280 : vector<2x32xf32>
    %282 = vector.extract_strided_slice %275 {offsets = [0, 32], sizes = [2, 32], strides = [1, 1]} : vector<2x128xf32> to vector<2x32xf32>
    %283 = arith.negf %282 : vector<2x32xf32>
    %284 = math.exp %283 : vector<2x32xf32>
    %cst_41 = arith.constant 1.000000e+00 : f32
    %285 = vector.broadcast %cst_41 : f32 to vector<2x32xf32>
    %286 = arith.addf %285, %284 : vector<2x32xf32>
    %287 = arith.divf %285, %286 : vector<2x32xf32>
    %288 = vector.extract_strided_slice %275 {offsets = [0, 64], sizes = [2, 32], strides = [1, 1]} : vector<2x128xf32> to vector<2x32xf32>
    %289 = math.tanh %288 : vector<2x32xf32>
    %290 = vector.extract_strided_slice %275 {offsets = [0, 96], sizes = [2, 32], strides = [1, 1]} : vector<2x128xf32> to vector<2x32xf32>
    %291 = arith.negf %290 : vector<2x32xf32>
    %292 = math.exp %291 : vector<2x32xf32>
    %cst_42 = arith.constant 1.000000e+00 : f32
    %293 = vector.broadcast %cst_42 : f32 to vector<2x32xf32>
    %294 = arith.addf %293, %292 : vector<2x32xf32>
    %295 = arith.divf %293, %294 : vector<2x32xf32>
    %296 = arith.mulf %287, %261 : vector<2x32xf32>
    %297 = arith.mulf %281, %289 : vector<2x32xf32>
    %298 = arith.addf %296, %297 : vector<2x32xf32>
    %299 = math.tanh %298 : vector<2x32xf32>
    %300 = arith.mulf %295, %299 : vector<2x32xf32>
    %c7_i32 = arith.constant 7 : i32
    %301 = vector.broadcast %c7_i32 : i32 to vector<1x8x1xi32>
    %302 = arith.cmpi eq, %11, %301 : vector<1x8x1xi32>
    %303 = vector.shape_cast %300 : vector<2x32xf32> to vector<2x1x32xf32>
    %304 = vector.shape_cast %302 : vector<1x8x1xi1> to vector<1x8x1xi1>
    %305 = vector.broadcast %304 : vector<1x8x1xi1> to vector<2x8x32xi1>
    %306 = vector.shape_cast %303 : vector<2x1x32xf32> to vector<2x1x32xf32>
    %307 = vector.broadcast %306 : vector<2x1x32xf32> to vector<2x8x32xf32>
    %308 = arith.select %305, %307, %271 : vector<2x8x32xi1>, vector<2x8x32xf32>
    %c0_43 = arith.constant 0 : index
    %c0_44 = arith.constant 0 : index
    %309 = vector.load %arg3[%c0_43, %c0_44] : memref<2x8xf32, #tpu.memory_space<vmem>>, vector<2x8xf32>
    %cst_45 = arith.constant dense<0.000000e+00> : vector<2xf32>
    %310 = vector.multi_reduction <add>, %309, %cst_45 [1] : vector<2x8xf32> to vector<2xf32>
    %311 = vector.shape_cast %310 : vector<2xf32> to vector<2x1xf32>
    %312 = tpu.iota {dimensions = array<i32: 1>} : vector<2x8xi32>
    %313 = arith.sitofp %312 : vector<2x8xi32> to vector<2x8xf32>
    %314 = vector.broadcast %311 : vector<2x1xf32> to vector<2x8xf32>
    %315 = arith.cmpf olt, %313, %314 : vector<2x8xf32>
    %316 = arith.extui %315 : vector<2x8xi1> to vector<2x8xi32>
    %317 = arith.sitofp %316 : vector<2x8xi32> to vector<2x8xf32>
    %318 = vector.shape_cast %317 : vector<2x8xf32> to vector<2x8x1xf32>
    %319 = vector.broadcast %318 : vector<2x8x1xf32> to vector<2x8x32xf32>
    %320 = arith.mulf %308, %319 : vector<2x8x32xf32>
    %321 = vector.extract_strided_slice %320 {offsets = [0, 7, 0], sizes = [2, 1, 32], strides = [1, 1, 1]} : vector<2x8x32xf32> to vector<2x1x32xf32>
    %322 = vector.shape_cast %321 : vector<2x1x32xf32> to vector<2x32xf32>
    %323 = vector.shape_cast %320 : vector<2x8x32xf32> to vector<16x32xf32>
    %c0_46 = arith.constant 0 : index
    %c0_47 = arith.constant 0 : index
    %324 = vector.load %arg7[%c0_46, %c0_47] : memref<32x16xf32, #tpu.memory_space<vmem>>, vector<32x16xf32>
    %cst_48 = arith.constant dense<0.000000e+00> : vector<16x16xf32>
    %325 = tpu.matmul %323, %324, %cst_48 {dimension_numbers = #tpu.dot_dimension_numbers<[1], [0], [0], [1], [0, 0, 1, 1], [], []>} : vector<16x32xf32>, vector<32x16xf32>, vector<16x16xf32> -> vector<16x16xf32>
    %326 = vector.shape_cast %325 : vector<16x16xf32> to vector<2x8x16xf32>
    %c0_49 = arith.constant 0 : index
    %c0_50 = arith.constant 0 : index
    %327 = vector.load %arg8[%c0_49, %c0_50] : memref<32x16xf32, #tpu.memory_space<vmem>>, vector<32x16xf32>
    %cst_51 = arith.constant dense<0.000000e+00> : vector<2x16xf32>
    %328 = tpu.matmul %322, %327, %cst_51 {dimension_numbers = #tpu.dot_dimension_numbers<[1], [0], [0], [1], [0, 0, 1, 1], [], []>} : vector<2x32xf32>, vector<32x16xf32>, vector<2x16xf32> -> vector<2x16xf32>
    %c0_52 = arith.constant 0 : index
    %c0_53 = arith.constant 0 : index
    %c0_54 = arith.constant 0 : index
    %329 = vector.load %arg2[%c0_52, %c0_53, %c0_54] : memref<2x8x16xf32, #tpu.memory_space<vmem>>, vector<2x8x16xf32>
    %330 = vector.shape_cast %329 : vector<2x8x16xf32> to vector<16x16xf32>
    %c0_55 = arith.constant 0 : index
    %c0_56 = arith.constant 0 : index
    %331 = vector.load %arg9[%c0_55, %c0_56] : memref<16x16xf32, #tpu.memory_space<vmem>>, vector<16x16xf32>
    %cst_57 = arith.constant dense<0.000000e+00> : vector<16x16xf32>
    %332 = tpu.matmul %330, %331, %cst_57 {dimension_numbers = #tpu.dot_dimension_numbers<[1], [0], [0], [1], [0, 0, 1, 1], [], []>} : vector<16x16xf32>, vector<16x16xf32>, vector<16x16xf32> -> vector<16x16xf32>
    %333 = vector.shape_cast %332 : vector<16x16xf32> to vector<2x8x16xf32>
    %334 = arith.addf %326, %333 : vector<2x8x16xf32>
    %335 = vector.shape_cast %328 : vector<2x16xf32> to vector<2x1x16xf32>
    %336 = vector.broadcast %335 : vector<2x1x16xf32> to vector<2x8x16xf32>
    %337 = arith.addf %334, %336 : vector<2x8x16xf32>
    %c0_58 = arith.constant 0 : index
    %c0_59 = arith.constant 0 : index
    %338 = vector.load %arg11[%c0_58, %c0_59] : memref<1x16xf32, #tpu.memory_space<vmem>>, vector<1x16xf32>
    %339 = vector.shape_cast %338 : vector<1x16xf32> to vector<1x1x16xf32>
    %340 = vector.broadcast %339 : vector<1x1x16xf32> to vector<2x8x16xf32>
    %341 = arith.addf %337, %340 : vector<2x8x16xf32>
    %342 = math.tanh %341 : vector<2x8x16xf32>
    %c0_60 = arith.constant 0 : index
    %c0_61 = arith.constant 0 : index
    %343 = vector.load %arg10[%c0_60, %c0_61] : memref<1x16xf32, #tpu.memory_space<vmem>>, vector<1x16xf32>
    %344 = vector.shape_cast %343 : vector<1x16xf32> to vector<1x1x16xf32>
    %345 = vector.broadcast %344 : vector<1x1x16xf32> to vector<2x8x16xf32>
    %346 = arith.mulf %342, %345 : vector<2x8x16xf32>
    %cst_62 = arith.constant dense<0.000000e+00> : vector<2x8xf32>
    %347 = vector.multi_reduction <add>, %346, %cst_62 [2] : vector<2x8x16xf32> to vector<2x8xf32>
    %c0_63 = arith.constant 0 : index
    %c0_64 = arith.constant 0 : index
    %348 = vector.load %arg12[%c0_63, %c0_64] : memref<1x1xf32, #tpu.memory_space<vmem>>, vector<1x1xf32>
    %349 = vector.broadcast %348 : vector<1x1xf32> to vector<2x8xf32>
    %350 = arith.addf %347, %349 : vector<2x8xf32>
    %cst_65 = arith.constant 0.000000e+00 : f32
    %351 = vector.broadcast %cst_65 : f32 to vector<2x8xf32>
    %352 = arith.cmpf ogt, %309, %351 : vector<2x8xf32>
    %cst_66 = arith.constant -1.000000e+30 : f32
    %353 = vector.broadcast %cst_66 : f32 to vector<2x8xf32>
    %354 = arith.select %352, %350, %353 : vector<2x8xi1>, vector<2x8xf32>
    %cst_67 = arith.constant dense<0xFF800000> : vector<2xf32>
    %355 = vector.multi_reduction <maximumf>, %354, %cst_67 [1] : vector<2x8xf32> to vector<2xf32>
    %356 = vector.shape_cast %355 : vector<2xf32> to vector<2x1xf32>
    %357 = vector.broadcast %356 : vector<2x1xf32> to vector<2x8xf32>
    %358 = arith.subf %354, %357 : vector<2x8xf32>
    %359 = math.exp %358 : vector<2x8xf32>
    %cst_68 = arith.constant dense<0.000000e+00> : vector<2xf32>
    %360 = vector.multi_reduction <add>, %359, %cst_68 [1] : vector<2x8xf32> to vector<2xf32>
    %361 = vector.shape_cast %360 : vector<2xf32> to vector<2x1xf32>
    %362 = tpu.reciprocal %361 {approx = true} : vector<2x1xf32> -> vector<2x1xf32>
    %363 = vector.broadcast %362 : vector<2x1xf32> to vector<2x8xf32>
    %364 = arith.mulf %359, %363 : vector<2x8xf32>
    %365 = vector.shape_cast %364 : vector<2x8xf32> to vector<2x8x1xf32>
    %366 = vector.broadcast %365 : vector<2x8x1xf32> to vector<2x8x32xf32>
    %367 = arith.mulf %366, %320 : vector<2x8x32xf32>
    %cst_69 = arith.constant dense<0.000000e+00> : vector<2x32xf32>
    %368 = vector.multi_reduction <add>, %367, %cst_69 [1] : vector<2x8x32xf32> to vector<2x32xf32>
    %c0_70 = arith.constant 0 : index
    %c0_71 = arith.constant 0 : index
    %369 = vector.load %arg13[%c0_70, %c0_71] : memref<32x5xf32, #tpu.memory_space<vmem>>, vector<32x5xf32>
    %cst_72 = arith.constant dense<0.000000e+00> : vector<2x5xf32>
    %370 = tpu.matmul %368, %369, %cst_72 {dimension_numbers = #tpu.dot_dimension_numbers<[1], [0], [0], [1], [0, 0, 1, 1], [], []>} : vector<2x32xf32>, vector<32x5xf32>, vector<2x5xf32> -> vector<2x5xf32>
    %c0_73 = arith.constant 0 : index
    %c0_74 = arith.constant 0 : index
    %371 = vector.load %arg14[%c0_73, %c0_74] : memref<1x5xf32, #tpu.memory_space<vmem>>, vector<1x5xf32>
    %372 = vector.broadcast %371 : vector<1x5xf32> to vector<2x5xf32>
    %373 = arith.addf %370, %372 : vector<2x5xf32>
    %c0_75 = arith.constant 0 : index
    %c0_76 = arith.constant 0 : index
    %374 = vector.load %arg15[%c0_75, %c0_76] : memref<2x5xf32, #tpu.memory_space<vmem>>, vector<2x5xf32>
    tpu.vector_store %arg15[%c0_75, %c0_76], %373 {strides = array<i32>} : memref<2x5xf32, #tpu.memory_space<vmem>>, vector<2x5xf32>,
    return
  }
  func.func @transform_0(%arg0: i32) -> (i32, i32, i32) {
    %c0_i32 = arith.constant 0 : i32
    %c0_i32_0 = arith.constant 0 : i32
    %c0_i32_1 = arith.constant 0 : i32
    %c0_i32_2 = arith.constant 0 : i32
    return %c0_i32, %c0_i32_0, %c0_i32_1 : i32, i32, i32
  }
  func.func @transform_1(%arg0: i32) -> (i32, i32, i32) {
    %c0_i32 = arith.constant 0 : i32
    %c0_i32_0 = arith.constant 0 : i32
    %c0_i32_1 = arith.constant 0 : i32
    %c0_i32_2 = arith.constant 0 : i32
    return %c0_i32, %c0_i32_0, %c0_i32_1 : i32, i32, i32
  }
  func.func @transform_2(%arg0: i32) -> (i32, i32) {
    %c0_i32 = arith.constant 0 : i32
    %c0_i32_0 = arith.constant 0 : i32
    %c0_i32_1 = arith.constant 0 : i32
    return %c0_i32, %c0_i32_0 : i32, i32
  }
  func.func @transform_3(%arg0: i32) -> (i32, i32) {
    %c0_i32 = arith.constant 0 : i32
    %c0_i32_0 = arith.constant 0 : i32
    %c0_i32_1 = arith.constant 0 : i32
    return %c0_i32, %c0_i32_0 : i32, i32
  }
  func.func @transform_4(%arg0: i32) -> (i32, i32) {
    %c0_i32 = arith.constant 0 : i32
    %c0_i32_0 = arith.constant 0 : i32
    %c0_i32_1 = arith.constant 0 : i32
    return %c0_i32, %c0_i32_0 : i32, i32
  }
  func.func @transform_5(%arg0: i32) -> (i32, i32) {
    %c0_i32 = arith.constant 0 : i32
    %c0_i32_0 = arith.constant 0 : i32
    %c0_i32_1 = arith.constant 0 : i32
    return %c0_i32, %c0_i32_0 : i32, i32
  }
  func.func @transform_6(%arg0: i32) -> (i32, i32) {
    %c0_i32 = arith.constant 0 : i32
    %c0_i32_0 = arith.constant 0 : i32
    %c0_i32_1 = arith.constant 0 : i32
    return %c0_i32, %c0_i32_0 : i32, i32
  }
  func.func @transform_7(%arg0: i32) -> (i32, i32) {
    %c0_i32 = arith.constant 0 : i32
    %c0_i32_0 = arith.constant 0 : i32
    %c0_i32_1 = arith.constant 0 : i32
    return %c0_i32, %c0_i32_0 : i32, i32
  }
  func.func @transform_8(%arg0: i32) -> (i32, i32) {
    %c0_i32 = arith.constant 0 : i32
    %c0_i32_0 = arith.constant 0 : i32
    %c0_i32_1 = arith.constant 0 : i32
    return %c0_i32, %c0_i32_0 : i32, i32
  }
  func.func @transform_9(%arg0: i32) -> (i32, i32) {
    %c0_i32 = arith.constant 0 : i32
    %c0_i32_0 = arith.constant 0 : i32
    %c0_i32_1 = arith.constant 0 : i32
    return %c0_i32, %c0_i32_0 : i32, i32
  }
  func.func @transform_10(%arg0: i32) -> (i32, i32) {
    %c0_i32 = arith.constant 0 : i32
    %c0_i32_0 = arith.constant 0 : i32
    %c0_i32_1 = arith.constant 0 : i32
    return %c0_i32, %c0_i32_0 : i32, i32
  }
  func.func @transform_11(%arg0: i32) -> (i32, i32) {
    %c0_i32 = arith.constant 0 : i32
    %c0_i32_0 = arith.constant 0 : i32
    %c0_i32_1 = arith.constant 0 : i32
    return %c0_i32, %c0_i32_0 : i32, i32
  }
  func.func @transform_12(%arg0: i32) -> (i32, i32) {
    %c0_i32 = arith.constant 0 : i32
    %c0_i32_0 = arith.constant 0 : i32
    %c0_i32_1 = arith.constant 0 : i32
    return %c0_i32, %c0_i32_0 : i32, i32
  }
  func.func @transform_13(%arg0: i32) -> (i32, i32) {
    %c0_i32 = arith.constant 0 : i32
    %c0_i32_0 = arith.constant 0 : i32
    %c0_i32_1 = arith.constant 0 : i32
    return %c0_i32, %c0_i32_0 : i32, i32
  }
  func.func @transform_14(%arg0: i32) -> (i32, i32) {
    %c0_i32 = arith.constant 0 : i32
    %c0_i32_0 = arith.constant 0 : i32
    %c0_i32_1 = arith.constant 0 : i32
    return %c0_i32, %c0_i32_0 : i32, i32
  }
}

</mosaic_0001>

<llo_original>
// kernel: pallas_forward.1
$region0: #{pallas_forward.1}
  #allocation0 [shape = 'u32[]', space=smem, size = 0x4, offset = 0x4, fixed_abs, tag = 'smem constant byte address 0x4 - core index']
  #allocation1 [shape = 'u32[144,128]{1,0:T(1,128)}', space=vmem, size = 0x12000, scoped, tag = 'internal scratch']
  #allocation2 [shape = 'f32[1,1]{1,0:T(1,128)S(1)}', space=vmem, size = 0x200, scoped, tag = 'scoped memory for pallas_forward.1']
  %s0 = inlined_call_operand.vmem [shape: f32[2,8,32], index: 0, kind: input, shape index: {}]
  %s1 = inlined_call_operand.vmem [shape: f32[2,8,16], index: 1, kind: input, shape index: {}]
  %s2 = inlined_call_operand.vmem [shape: f32[2,8], index: 2, kind: input, shape index: {}]
  %s3 = inlined_call_operand.vmem [shape: f32[32,128], index: 3, kind: input, shape index: {}]
  %s4 = inlined_call_operand.vmem [shape: f32[32,128], index: 4, kind: input, shape index: {}]
  %s5 = inlined_call_operand.vmem [shape: f32[1,128], index: 5, kind: input, shape index: {}]
  %s6 = inlined_call_operand.vmem [shape: f32[32,16], index: 6, kind: input, shape index: {}]
  %s7 = inlined_call_operand.vmem [shape: f32[32,16], index: 7, kind: input, shape index: {}]
  %s8 = inlined_call_operand.vmem [shape: f32[16,16], index: 8, kind: input, shape index: {}]
  %s9 = inlined_call_operand.vmem [shape: f32[1,16], index: 9, kind: input, shape index: {}]
  %s10 = inlined_call_operand.vmem [shape: f32[1,16], index: 10, kind: input, shape index: {}]
  %s11 = inlined_call_operand.<no memory space> [shape: f32[1,1], index: 11, kind: input, shape index: {}]
  %s12 = inlined_call_operand.vmem [shape: f32[32,5], index: 12, kind: input, shape index: {}]
  %s13 = inlined_call_operand.vmem [shape: f32[1,5], index: 13, kind: input, shape index: {}]
  %s14 = inlined_call_operand.hbm [shape: f32[2,5], index: 14, kind: output, shape index: {}]
  %s15 = sld [smem:[#allocation0]]
  $region66: #{pallas_forward.1} parent=0
    _
  %s17 = ssub.s32 1, %s15
  %s18 = scalar_select 0, %s17, %s15
  %v19 = vstv %s11
  %20 = vst [vmem:[#allocation2] sm:$0x1] %v19
  $region1: #{pallas_forward.1} parent=0
    #allocation3 [shape = 'u8[1024]{0}', space=vmem, size = 0x400, scoped, tag = 'output window, operand 0, single buffered']
    #allocation4 [shape = 's32[1]{0}', space=sflag, size = 0x4, scoped, tag = 'scoped memory for pallas_forward.1']
    %21 = vsyncpa [#allocation4], 0
    // Predicated region
    $region2: #{pallas_forward.1} parent=1 // pred_check
      _
    $region3: #{pallas_forward.1} parent=1 // pred_check_branch
      %23 = sbr.rel (0) target = $region5
    $region4: #{pallas_forward.1} parent=1 // pred_region
      _
    $region5: #{pallas_forward.1} parent=1 // pred_fallthru
      _
    // Predicated region
    $region6: #{pallas_forward.1} parent=1 // pred_check
      _
    $region7: #{pallas_forward.1} parent=1 // pred_check_branch
      %25 = sbr.rel (0) target = $region9
    $region8: #{pallas_forward.1} parent=1 // pred_region
      _
    $region9: #{pallas_forward.1} parent=1 // pred_fallthru
      _
    // Predicated region
    $region10: #{pallas_forward.1} parent=1 // pred_check
      _
    $region11: #{pallas_forward.1} parent=1 // pred_check_branch
      %27 = sbr.rel (0) target = $region13
    $region12: #{pallas_forward.1} parent=1 // pred_region
      _
    $region13: #{pallas_forward.1} parent=1 // pred_fallthru
      _
    // Predicated region
    $region14: #{pallas_forward.1} parent=1 // pred_check
      _
    $region15: #{pallas_forward.1} parent=1 // pred_check_branch
      %29 = sbr.rel (0) target = $region17
    $region16: #{pallas_forward.1} parent=1 // pred_region
      _
    $region17: #{pallas_forward.1} parent=1 // pred_fallthru
      _
    // Predicated region
    $region18: #{pallas_forward.1} parent=1 // pred_check
      _
    $region19: #{pallas_forward.1} parent=1 // pred_check_branch
      %31 = sbr.rel (0) target = $region21
    $region20: #{pallas_forward.1} parent=1 // pred_region
      _
    $region21: #{pallas_forward.1} parent=1 // pred_fallthru
      _
    // Predicated region
    $region22: #{pallas_forward.1} parent=1 // pred_check
      _
    $region23: #{pallas_forward.1} parent=1 // pred_check_branch
      %33 = sbr.rel (0) target = $region25
    $region24: #{pallas_forward.1} parent=1 // pred_region
      _
    $region25: #{pallas_forward.1} parent=1 // pred_fallthru
      _
    // Predicated region
    $region26: #{pallas_forward.1} parent=1 // pred_check
      _
    $region27: #{pallas_forward.1} parent=1 // pred_check_branch
      %35 = sbr.rel (0) target = $region29
    $region28: #{pallas_forward.1} parent=1 // pred_region
      _
    $region29: #{pallas_forward.1} parent=1 // pred_fallthru
      _
    // Predicated region
    $region30: #{pallas_forward.1} parent=1 // pred_check
      _
    $region31: #{pallas_forward.1} parent=1 // pred_check_branch
      %37 = sbr.rel (0) target = $region33
    $region32: #{pallas_forward.1} parent=1 // pred_region
      _
    $region33: #{pallas_forward.1} parent=1 // pred_fallthru
      _
    // Predicated region
    $region34: #{pallas_forward.1} parent=1 // pred_check
      _
    $region35: #{pallas_forward.1} parent=1 // pred_check_branch
      %39 = sbr.rel (0) target = $region37
    $region36: #{pallas_forward.1} parent=1 // pred_region
      _
    $region37: #{pallas_forward.1} parent=1 // pred_fallthru
      _
    // Predicated region
    $region38: #{pallas_forward.1} parent=1 // pred_check
      _
    $region39: #{pallas_forward.1} parent=1 // pred_check_branch
      %41 = sbr.rel (0) target = $region41
    $region40: #{pallas_forward.1} parent=1 // pred_region
      _
    $region41: #{pallas_forward.1} parent=1 // pred_fallthru
      _
    // Predicated region
    $region42: #{pallas_forward.1} parent=1 // pred_check
      _
    $region43: #{pallas_forward.1} parent=1 // pred_check_branch
      %43 = sbr.rel (0) target = $region45
    $region44: #{pallas_forward.1} parent=1 // pred_region
      _
    $region45: #{pallas_forward.1} parent=1 // pred_fallthru
      _
    // Predicated region
    $region46: #{pallas_forward.1} parent=1 // pred_check
      _
    $region47: #{pallas_forward.1} parent=1 // pred_check_branch
      %45 = sbr.rel (0) target = $region49
    $region48: #{pallas_forward.1} parent=1 // pred_region
      _
    $region49: #{pallas_forward.1} parent=1 // pred_fallthru
      _
    // Predicated region
    $region50: #{pallas_forward.1} parent=1 // pred_check
      _
    $region51: #{pallas_forward.1} parent=1 // pred_check_branch
      %47 = sbr.rel (0) target = $region53
    $region52: #{pallas_forward.1} parent=1 // pred_region
      _
    $region53: #{pallas_forward.1} parent=1 // pred_fallthru
      _
    // Predicated region
    $region54: #{pallas_forward.1} parent=1 // pred_check
      _
    $region55: #{pallas_forward.1} parent=1 // pred_check_branch
      %49 = sbr.rel (0) target = $region57
    $region56: #{pallas_forward.1} parent=1 // pred_region
      _
    $region57: #{pallas_forward.1} parent=1 // pred_fallthru
      _
    %v50 = vld [vmem:[%s0] sm:$0xff]
    %v51 = vld [vmem:[%s0 + $0x8] sm:$0xff]
    %v52 = vld [vmem:[%s3] sm:$0xff]
    %v53 = vld [vmem:[%s3 + $0x8] sm:$0xff]
    %v54 = vld [vmem:[%s3 + $0x10] sm:$0xff]
    %v55 = vld [vmem:[%s3 + $0x18] sm:$0xff]
    %v56 = vld [vmem:[%s5] sm:$0x1]
    %v58 = vlaneseq
    %v59 = vshrl.u32 %v58, 7
    %v60 = vsub.s32 0, %v59
    %v61 = vrot.slane %v56, %v60
    %vm63 = vcmask 261120
    %v65 = vsel %vm63, %v50, 0
    %v68 = vsel %vm63, %v51, 0
    %70 = vmatprep.subr.mxu0 0.0
    %71 = vmatpush1.msra.mxu0 %v52
    %72 = vmatprep.subr.mxu0 0.0
    %73 = vmatpush1.msra.mxu0 %v53
    %74 = vmatprep.subr.mxu0 0.0
    %75 = vmatpush1.msra.mxu0 %v54
    %76 = vmatprep.subr.mxu0 0.0
    %77 = vmatpush1.msra.mxu0 %v55
    %78 = vmatprep.subr.mxu0 0.0
    %79 = vmatpush1.msra.mxu0 0.0
    %80 = vmatprep.subr.mxu0 0.0
    %81 = vmatpush1.msra.mxu0 0.0
    %82 = vmatprep.subr.mxu0 0.0
    %83 = vmatpush1.msra.mxu0 0.0
    %84 = vmatprep.subr.mxu0 0.0
    %85 = vmatpush1.msra.mxu0 0.0
    %86 = vmatprep.subr.mxu0 0.0
    %87 = vmatpush1.msra.mxu0 0.0
    %88 = vmatprep.subr.mxu0 0.0
    %89 = vmatpush1.msra.mxu0 0.0
    %90 = vmatprep.subr.mxu0 0.0
    %91 = vmatpush1.msra.mxu0 0.0
    %92 = vmatprep.subr.mxu0 0.0
    %93 = vmatpush1.msra.mxu0 0.0
    %94 = vmatprep.subr.mxu0 0.0
    %95 = vmatpush1.msra.mxu0 0.0
    %96 = vmatprep.subr.mxu0 0.0
    %97 = vmatpush1.msra.mxu0 0.0
    %98 = vmatprep.subr.mxu0 0.0
    %99 = vmatpush1.msra.mxu0 0.0
    %100 = vmatprep.subr.mxu0 0.0
    %101 = vmatpush1.msra.mxu0 0.0
    %102 = vmatprep.subr.mxu0 0.0
    %103 = vmatpush1.msra.mxu0 0.0
    %104 = vmatprep.subr.mxu0 0.0
    %105 = vmatpush1.msra.mxu0 0.0
    %106 = vmatprep.subr.mxu0 0.0
    %107 = vmatpush1.msra.mxu0 0.0
    %108 = vmatprep.subr.mxu0 0.0
    %109 = vmatpush1.msra.mxu0 0.0
    %110 = vmatprep.subr.mxu0 0.0
    %111 = vmatpush1.msra.mxu0 0.0
    %112 = vmatprep.subr.mxu0 0.0
    %113 = vmatpush1.msra.mxu0 0.0
    %114 = vmatprep.subr.mxu0 0.0
    %115 = vmatpush1.msra.mxu0 0.0
    %116 = vmatprep.subr.mxu0 0.0
    %117 = vmatpush1.msra.mxu0 0.0
    %118 = vmatprep.subr.mxu0 0.0
    %119 = vmatpush1.msra.mxu0 0.0
    %120 = vmatprep.subr.mxu0 0.0
    %121 = vmatpush1.msra.mxu0 0.0
    %122 = vmatprep.subr.mxu0 0.0
    %123 = vmatpush1.msra.mxu0 0.0
    %124 = vmatprep.subr.mxu0 0.0
    %125 = vmatpush1.msra.mxu0 0.0
    %126 = vmatprep.subr.mxu0 0.0
    %127 = vmatpush1.msra.mxu0 0.0
    %128 = vmatprep.subr.mxu0 0.0
    %129 = vmatpush1.msra.mxu0 0.0
    %130 = vmatprep.subr.mxu0 0.0
    %131 = vmatpush1.msra.mxu0 0.0
    %132 = vmatprep.subr.mxu0 0.0
    %133 = vmatpush1.msra.mxu0 0.0
    %134 = vmatprep.mubr.f32.mxu0 0.0
    %135 = vmatmul.mubr.f32.gmra.mrb[0].mxu0 %v65
    %v136 = vpop.f32.mrb[0].mxu0
    %v137 = vadd.f32 %v61, %v136
    %v138 = vpop.f32.mrb[0].mxu0
    %139 = vmatprep.mubr.f32.mxu0 0.0
    %140 = vmatmul.mubr.f32.gmra.mrb[0].mxu0 %v68
    %v141 = vpop.f32.mrb[0].mxu0
    %v142 = vadd.f32 %v61, %v141
    %v143 = vpop.f32.mrb[0].mxu0
    %144 = vdwg.mxu0
    %v145 = vld [vmem:[%s4] sm:$0xff]
    %v146 = vld [vmem:[%s4 + $0x8] sm:$0xff]
    %v147 = vld [vmem:[%s4 + $0x10] sm:$0xff]
    %v148 = vld [vmem:[%s4 + $0x18] sm:$0xff]
    %v149 = vlaneseq
    %v150 = vshrl.u32 %v149, 7
    %v152 = vsel %vm63, 0.0, 0
    %154 = vmatprep.subr.mxu0 0.0
    %155 = vmatpush1.msra.mxu0 %v145
    %156 = vmatprep.subr.mxu0 0.0
    %157 = vmatpush1.msra.mxu0 %v146
    %158 = vmatprep.subr.mxu0 0.0
    %159 = vmatpush1.msra.mxu0 %v147
    %160 = vmatprep.subr.mxu0 0.0
    %161 = vmatpush1.msra.mxu0 %v148
    %162 = vmatprep.subr.mxu0 0.0
    %163 = vmatpush1.msra.mxu0 0.0
    %164 = vmatprep.subr.mxu0 0.0
    %165 = vmatpush1.msra.mxu0 0.0
    %166 = vmatprep.subr.mxu0 0.0
    %167 = vmatpush1.msra.mxu0 0.0
    %168 = vmatprep.subr.mxu0 0.0
    %169 = vmatpush1.msra.mxu0 0.0
    %170 = vmatprep.subr.mxu0 0.0
    %171 = vmatpush1.msra.mxu0 0.0
    %172 = vmatprep.subr.mxu0 0.0
    %173 = vmatpush1.msra.mxu0 0.0
    %174 = vmatprep.subr.mxu0 0.0
    %175 = vmatpush1.msra.mxu0 0.0
    %176 = vmatprep.subr.mxu0 0.0
    %177 = vmatpush1.msra.mxu0 0.0
    %178 = vmatprep.subr.mxu0 0.0
    %179 = vmatpush1.msra.mxu0 0.0
    %180 = vmatprep.subr.mxu0 0.0
    %181 = vmatpush1.msra.mxu0 0.0
    %182 = vmatprep.subr.mxu0 0.0
    %183 = vmatpush1.msra.mxu0 0.0
    %184 = vmatprep.subr.mxu0 0.0
    %185 = vmatpush1.msra.mxu0 0.0
    %186 = vmatprep.subr.mxu0 0.0
    %187 = vmatpush1.msra.mxu0 0.0
    %188 = vmatprep.subr.mxu0 0.0
    %189 = vmatpush1.msra.mxu0 0.0
    %190 = vmatprep.subr.mxu0 0.0
    %191 = vmatpush1.msra.mxu0 0.0
    %192 = vmatprep.subr.mxu0 0.0
    %193 = vmatpush1.msra.mxu0 0.0
    %194 = vmatprep.subr.mxu0 0.0
    %195 = vmatpush1.msra.mxu0 0.0
    %196 = vmatprep.subr.mxu0 0.0
    %197 = vmatpush1.msra.mxu0 0.0
    %198 = vmatprep.subr.mxu0 0.0
    %199 = vmatpush1.msra.mxu0 0.0
    %200 = vmatprep.subr.mxu0 0.0
    %201 = vmatpush1.msra.mxu0 0.0
    %202 = vmatprep.subr.mxu0 0.0
    %203 = vmatpush1.msra.mxu0 0.0
    %204 = vmatprep.subr.mxu0 0.0
    %205 = vmatpush1.msra.mxu0 0.0
    %206 = vmatprep.subr.mxu0 0.0
    %207 = vmatpush1.msra.mxu0 0.0
    %208 = vmatprep.subr.mxu0 0.0
    %209 = vmatpush1.msra.mxu0 0.0
    %210 = vmatprep.subr.mxu0 0.0
    %211 = vmatpush1.msra.mxu0 0.0
    %212 = vmatprep.subr.mxu0 0.0
    %213 = vmatpush1.msra.mxu0 0.0
    %214 = vmatprep.subr.mxu0 0.0
    %215 = vmatpush1.msra.mxu0 0.0
    %216 = vmatprep.subr.mxu0 0.0
    %217 = vmatpush1.msra.mxu0 0.0
    %218 = vmatprep.mubr.f32.mxu0 0.0
    %219 = vmatmul.mubr.f32.gmra.mrb[0].mxu0 %v152
    %v220 = vpop.f32.mrb[0].mxu0
    %v221 = vadd.f32 0.0, %v220
    %v222 = vpop.f32.mrb[0].mxu0
    %223 = vdwg.mxu0
    %v225 = vrot.slane %v221, 1
    %v228 = vadd.f32 %v137, %v221
    %v229 = vadd.f32 %v142, %v225
    %v230 = vxor.u32 %v228, 2147483648
    %v231 = vxor.u32 %v229, 2147483648
    %v232 = vmul.f32 %v230, 1.442695
    %v233 = vpow.pop %v232
    %v234 = vmul.f32 %v231, 1.442695
    %v235 = vpow.pop %v234
    %v236 = vadd.f32 %v233, 1.0
    %v237 = vadd.f32 %v235, 1.0
    %v238 = vrcp.pop %v236
    %v239 = vmul.f32 1.0, %v238
    %v240 = vrcp.pop %v237
    %v241 = vmul.f32 1.0, %v240
    %v242 = vtanh.pop %v228
    %v243 = vtanh.pop %v229
    %v244 = vmul.f32 %v239, 0.0
    %v245 = vmul.f32 %v241, 0.0
    %248 = vrot.lane.b32.xlu0 %v242, 64
    %v249 = vpop.permute.xlu0 %248
    %250 = vrot.lane.b32.xlu0 %v243, 64
    %v251 = vpop.permute.xlu0 %250
    %v254 = vmul.f32 %v239, %v249
    %v255 = vmul.f32 %v241, %v251
    %258 = vrot.lane.b32.xlu0 %v254, 32
    %v259 = vpop.permute.xlu0 %258
    %260 = vrot.lane.b32.xlu0 %v255, 32
    %v261 = vpop.permute.xlu0 %260
    %v264 = vadd.f32 %v244, %v259
    %v265 = vadd.f32 %v245, %v261
    %v266 = vtanh.pop %v264
    %v267 = vtanh.pop %v265
    %270 = vrot.lane.b32.xlu0 %v266, 64
    %v271 = vpop.permute.xlu0 %270
    %272 = vrot.lane.b32.xlu0 %v267, 64
    %v273 = vpop.permute.xlu0 %272
    %v276 = vmul.f32 %v239, %v271
    %v277 = vmul.f32 %v241, %v273
    %vm278 = vcmp.eq.s32.totalorder %v150, 0
    %v279 = vsel %vm278, 1, 0
    %vm280 = vcmp.eq.s32.totalorder %v279, 1
    %v281 = vlaneseq
    %v282 = vshrl.u32 %v281, 7
    %v283 = vsub.s32 0, %v282
    %v284 = vrot.slane %v276, %v283
    %v285 = vlaneseq
    %v286 = vshrl.u32 %v285, 7
    %v287 = vsub.s32 0, %v286
    %v288 = vrot.slane %v277, %v287
    %v289 = vsel %vm280, %v284, 0.0
    %v290 = vsel %vm280, %v288, 0.0
    %v293 = vrot.slane %v277, 7
    %vm294 = vcmask 1041409
    %v295 = vsel %vm294, %v293, %v276
    %296 = vrot.lane.b32.xlu0 %v295, 32
    %v297 = vpop.permute.xlu0 %296
    %v298 = vsel %vm63, %v297, 0
    %300 = vmatprep.subr.mxu0 0.0
    %301 = vmatpush1.msra.mxu0 %v145
    %302 = vmatprep.subr.mxu0 0.0
    %303 = vmatpush1.msra.mxu0 %v146
    %304 = vmatprep.subr.mxu0 0.0
    %305 = vmatpush1.msra.mxu0 %v147
    %306 = vmatprep.subr.mxu0 0.0
    %307 = vmatpush1.msra.mxu0 %v148
    %308 = vmatprep.subr.mxu0 0.0
    %309 = vmatpush1.msra.mxu0 0.0
    %310 = vmatprep.subr.mxu0 0.0
    %311 = vmatpush1.msra.mxu0 0.0
    %312 = vmatprep.subr.mxu0 0.0
    %313 = vmatpush1.msra.mxu0 0.0
    %314 = vmatprep.subr.mxu0 0.0
    %315 = vmatpush1.msra.mxu0 0.0
    %316 = vmatprep.subr.mxu0 0.0
    %317 = vmatpush1.msra.mxu0 0.0
    %318 = vmatprep.subr.mxu0 0.0
    %319 = vmatpush1.msra.mxu0 0.0
    %320 = vmatprep.subr.mxu0 0.0
    %321 = vmatpush1.msra.mxu0 0.0
    %322 = vmatprep.subr.mxu0 0.0
    %323 = vmatpush1.msra.mxu0 0.0
    %324 = vmatprep.subr.mxu0 0.0
    %325 = vmatpush1.msra.mxu0 0.0
    %326 = vmatprep.subr.mxu0 0.0
    %327 = vmatpush1.msra.mxu0 0.0
    %328 = vmatprep.subr.mxu0 0.0
    %329 = vmatpush1.msra.mxu0 0.0
    %330 = vmatprep.subr.mxu0 0.0
    %331 = vmatpush1.msra.mxu0 0.0
    %332 = vmatprep.subr.mxu0 0.0
    %333 = vmatpush1.msra.mxu0 0.0
    %334 = vmatprep.subr.mxu0 0.0
    %335 = vmatpush1.msra.mxu0 0.0
    %336 = vmatprep.subr.mxu0 0.0
    %337 = vmatpush1.msra.mxu0 0.0
    %338 = vmatprep.subr.mxu0 0.0
    %339 = vmatpush1.msra.mxu0 0.0
    %340 = vmatprep.subr.mxu0 0.0
    %341 = vmatpush1.msra.mxu0 0.0
    %342 = vmatprep.subr.mxu0 0.0
    %343 = vmatpush1.msra.mxu0 0.0
    %344 = vmatprep.subr.mxu0 0.0
    %345 = vmatpush1.msra.mxu0 0.0
    %346 = vmatprep.subr.mxu0 0.0
    %347 = vmatpush1.msra.mxu0 0.0
    %348 = vmatprep.subr.mxu0 0.0
    %349 = vmatpush1.msra.mxu0 0.0
    %350 = vmatprep.subr.mxu0 0.0
    %351 = vmatpush1.msra.mxu0 0.0
    %352 = vmatprep.subr.mxu0 0.0
    %353 = vmatpush1.msra.mxu0 0.0
    %354 = vmatprep.subr.mxu0 0.0
    %355 = vmatpush1.msra.mxu0 0.0
    %356 = vmatprep.subr.mxu0 0.0
    %357 = vmatpush1.msra.mxu0 0.0
    %358 = vmatprep.subr.mxu0 0.0
    %359 = vmatpush1.msra.mxu0 0.0
    %360 = vmatprep.subr.mxu0 0.0
    %361 = vmatpush1.msra.mxu0 0.0
    %362 = vmatprep.subr.mxu0 0.0
    %363 = vmatpush1.msra.mxu0 0.0
    %364 = vmatprep.mubr.f32.mxu0 0.0
    %365 = vmatmul.mubr.f32.gmra.mrb[0].mxu0 %v298
    %v366 = vpop.f32.mrb[0].mxu0
    %v367 = vadd.f32 0.0, %v366
    %v368 = vpop.f32.mrb[0].mxu0
    %369 = vdwg.mxu0
    %v371 = vrot.slane %v367, 7
    %v374 = vadd.f32 %v137, %v371
    %v375 = vadd.f32 %v142, %v367
    %v376 = vxor.u32 %v374, 2147483648
    %v377 = vxor.u32 %v375, 2147483648
    %v378 = vmul.f32 %v376, 1.442695
    %v379 = vpow.pop %v378
    %v380 = vmul.f32 %v377, 1.442695
    %v381 = vpow.pop %v380
    %v382 = vadd.f32 %v379, 1.0
    %v383 = vadd.f32 %v381, 1.0
    %v384 = vrcp.pop %v382
    %v385 = vmul.f32 1.0, %v384
    %v386 = vrcp.pop %v383
    %v387 = vmul.f32 1.0, %v386
    %v388 = vtanh.pop %v374
    %v389 = vtanh.pop %v375
    %v392 = vrot.slane %v264, 7
    %v393 = vrot.slane %v265, 7
    %v396 = vmul.f32 %v385, %v392
    %v397 = vmul.f32 %v387, %v393
    %400 = vrot.lane.b32.xlu0 %v388, 64
    %v401 = vpop.permute.xlu0 %400
    %402 = vrot.lane.b32.xlu0 %v389, 64
    %v403 = vpop.permute.xlu0 %402
    %v406 = vmul.f32 %v385, %v401
    %v407 = vmul.f32 %v387, %v403
    %410 = vrot.lane.b32.xlu0 %v406, 32
    %v411 = vpop.permute.xlu0 %410
    %412 = vrot.lane.b32.xlu0 %v407, 32
    %v413 = vpop.permute.xlu0 %412
    %v416 = vadd.f32 %v396, %v411
    %v417 = vadd.f32 %v397, %v413
    %v418 = vtanh.pop %v416
    %v419 = vtanh.pop %v417
    %422 = vrot.lane.b32.xlu0 %v418, 64
    %v423 = vpop.permute.xlu0 %422
    %424 = vrot.lane.b32.xlu0 %v419, 64
    %v425 = vpop.permute.xlu0 %424
    %v428 = vmul.f32 %v385, %v423
    %v429 = vmul.f32 %v387, %v425
    %vm430 = vcmp.eq.s32.totalorder %v150, 1
    %v431 = vsel %vm430, 1, 0
    %vm432 = vcmp.eq.s32.totalorder %v431, 1
    %v433 = vlaneseq
    %v434 = vshrl.u32 %v433, 7
    %v435 = vsub.s32 1, %v434
    %v436 = vrot.slane %v428, %v435
    %v437 = vlaneseq
    %v438 = vshrl.u32 %v437, 7
    %v439 = vsub.s32 1, %v438
    %v440 = vrot.slane %v429, %v439
    %v441 = vsel %vm432, %v436, %v289
    %v442 = vsel %vm432, %v440, %v290
    %v445 = vrot.slane %v428, 1
    %v446 = vsel %vm294, %v429, %v445
    %447 = vrot.lane.b32.xlu0 %v446, 32
    %v448 = vpop.permute.xlu0 %447
    %v449 = vsel %vm63, %v448, 0
    %451 = vmatprep.subr.mxu0 0.0
    %452 = vmatpush1.msra.mxu0 %v145
    %453 = vmatprep.subr.mxu0 0.0
    %454 = vmatpush1.msra.mxu0 %v146
    %455 = vmatprep.subr.mxu0 0.0
    %456 = vmatpush1.msra.mxu0 %v147
    %457 = vmatprep.subr.mxu0 0.0
    %458 = vmatpush1.msra.mxu0 %v148
    %459 = vmatprep.subr.mxu0 0.0
    %460 = vmatpush1.msra.mxu0 0.0
    %461 = vmatprep.subr.mxu0 0.0
    %462 = vmatpush1.msra.mxu0 0.0
    %463 = vmatprep.subr.mxu0 0.0
    %464 = vmatpush1.msra.mxu0 0.0
    %465 = vmatprep.subr.mxu0 0.0
    %466 = vmatpush1.msra.mxu0 0.0
    %467 = vmatprep.subr.mxu0 0.0
    %468 = vmatpush1.msra.mxu0 0.0
    %469 = vmatprep.subr.mxu0 0.0
    %470 = vmatpush1.msra.mxu0 0.0
    %471 = vmatprep.subr.mxu0 0.0
    %472 = vmatpush1.msra.mxu0 0.0
    %473 = vmatprep.subr.mxu0 0.0
    %474 = vmatpush1.msra.mxu0 0.0
    %475 = vmatprep.subr.mxu0 0.0
    %476 = vmatpush1.msra.mxu0 0.0
    %477 = vmatprep.subr.mxu0 0.0
    %478 = vmatpush1.msra.mxu0 0.0
    %479 = vmatprep.subr.mxu0 0.0
    %480 = vmatpush1.msra.mxu0 0.0
    %481 = vmatprep.subr.mxu0 0.0
    %482 = vmatpush1.msra.mxu0 0.0
    %483 = vmatprep.subr.mxu0 0.0
    %484 = vmatpush1.msra.mxu0 0.0
    %485 = vmatprep.subr.mxu0 0.0
    %486 = vmatpush1.msra.mxu0 0.0
    %487 = vmatprep.subr.mxu0 0.0
    %488 = vmatpush1.msra.mxu0 0.0
    %489 = vmatprep.subr.mxu0 0.0
    %490 = vmatpush1.msra.mxu0 0.0
    %491 = vmatprep.subr.mxu0 0.0
    %492 = vmatpush1.msra.mxu0 0.0
    %493 = vmatprep.subr.mxu0 0.0
    %494 = vmatpush1.msra.mxu0 0.0
    %495 = vmatprep.subr.mxu0 0.0
    %496 = vmatpush1.msra.mxu0 0.0
    %497 = vmatprep.subr.mxu0 0.0
    %498 = vmatpush1.msra.mxu0 0.0
    %499 = vmatprep.subr.mxu0 0.0
    %500 = vmatpush1.msra.mxu0 0.0
    %501 = vmatprep.subr.mxu0 0.0
    %502 = vmatpush1.msra.mxu0 0.0
    %503 = vmatprep.subr.mxu0 0.0
    %504 = vmatpush1.msra.mxu0 0.0
    %505 = vmatprep.subr.mxu0 0.0
    %506 = vmatpush1.msra.mxu0 0.0
    %507 = vmatprep.subr.mxu0 0.0
    %508 = vmatpush1.msra.mxu0 0.0
    %509 = vmatprep.subr.mxu0 0.0
    %510 = vmatpush1.msra.mxu0 0.0
    %511 = vmatprep.subr.mxu0 0.0
    %512 = vmatpush1.msra.mxu0 0.0
    %513 = vmatprep.subr.mxu0 0.0
    %514 = vmatpush1.msra.mxu0 0.0
    %515 = vmatprep.mubr.f32.mxu0 0.0
    %516 = vmatmul.mubr.f32.gmra.mrb[0].mxu0 %v449
    %v517 = vpop.f32.mrb[0].mxu0
    %v518 = vadd.f32 0.0, %v517
    %v519 = vpop.f32.mrb[0].mxu0
    %520 = vdwg.mxu0
    %v522 = vrot.slane %v518, 6
    %v523 = vrot.slane %v518, 7
    %v526 = vadd.f32 %v137, %v522
    %v527 = vadd.f32 %v142, %v523
    %v528 = vxor.u32 %v526, 2147483648
    %v529 = vxor.u32 %v527, 2147483648
    %v530 = vmul.f32 %v528, 1.442695
    %v531 = vpow.pop %v530
    %v532 = vmul.f32 %v529, 1.442695
    %v533 = vpow.pop %v532
    %v534 = vadd.f32 %v531, 1.0
    %v535 = vadd.f32 %v533, 1.0
    %v536 = vrcp.pop %v534
    %v537 = vmul.f32 1.0, %v536
    %v538 = vrcp.pop %v535
    %v539 = vmul.f32 1.0, %v538
    %v540 = vtanh.pop %v526
    %v541 = vtanh.pop %v527
    %v544 = vrot.slane %v416, 7
    %v545 = vrot.slane %v417, 7
    %v548 = vmul.f32 %v537, %v544
    %v549 = vmul.f32 %v539, %v545
    %552 = vrot.lane.b32.xlu0 %v540, 64
    %v553 = vpop.permute.xlu0 %552
    %554 = vrot.lane.b32.xlu0 %v541, 64
    %v555 = vpop.permute.xlu0 %554
    %v558 = vmul.f32 %v537, %v553
    %v559 = vmul.f32 %v539, %v555
    %562 = vrot.lane.b32.xlu0 %v558, 32
    %v563 = vpop.permute.xlu0 %562
    %564 = vrot.lane.b32.xlu0 %v559, 32
    %v565 = vpop.permute.xlu0 %564
    %v568 = vadd.f32 %v548, %v563
    %v569 = vadd.f32 %v549, %v565
    %v570 = vtanh.pop %v568
    %v571 = vtanh.pop %v569
    %574 = vrot.lane.b32.xlu0 %v570, 64
    %v575 = vpop.permute.xlu0 %574
    %576 = vrot.lane.b32.xlu0 %v571, 64
    %v577 = vpop.permute.xlu0 %576
    %v580 = vmul.f32 %v537, %v575
    %v581 = vmul.f32 %v539, %v577
    %vm582 = vcmp.eq.s32.totalorder %v150, 2
    %v583 = vsel %vm582, 1, 0
    %vm584 = vcmp.eq.s32.totalorder %v583, 1
    %v585 = vlaneseq
    %v586 = vshrl.u32 %v585, 7
    %v587 = vsub.s32 2, %v586
    %v588 = vrot.slane %v580, %v587
    %v589 = vlaneseq
    %v590 = vshrl.u32 %v589, 7
    %v591 = vsub.s32 2, %v590
    %v592 = vrot.slane %v581, %v591
    %v593 = vsel %vm584, %v588, %v441
    %v594 = vsel %vm584, %v592, %v442
    %v597 = vrot.slane %v580, 2
    %v598 = vrot.slane %v581, 1
    %v599 = vsel %vm294, %v598, %v597
    %600 = vrot.lane.b32.xlu0 %v599, 32
    %v601 = vpop.permute.xlu0 %600
    %v602 = vsel %vm63, %v601, 0
    %604 = vmatprep.subr.mxu0 0.0
    %605 = vmatpush1.msra.mxu0 %v145
    %606 = vmatprep.subr.mxu0 0.0
    %607 = vmatpush1.msra.mxu0 %v146
    %608 = vmatprep.subr.mxu0 0.0
    %609 = vmatpush1.msra.mxu0 %v147
    %610 = vmatprep.subr.mxu0 0.0
    %611 = vmatpush1.msra.mxu0 %v148
    %612 = vmatprep.subr.mxu0 0.0
    %613 = vmatpush1.msra.mxu0 0.0
    %614 = vmatprep.subr.mxu0 0.0
    %615 = vmatpush1.msra.mxu0 0.0
    %616 = vmatprep.subr.mxu0 0.0
    %617 = vmatpush1.msra.mxu0 0.0
    %618 = vmatprep.subr.mxu0 0.0
    %619 = vmatpush1.msra.mxu0 0.0
    %620 = vmatprep.subr.mxu0 0.0
    %621 = vmatpush1.msra.mxu0 0.0
    %622 = vmatprep.subr.mxu0 0.0
    %623 = vmatpush1.msra.mxu0 0.0
    %624 = vmatprep.subr.mxu0 0.0
    %625 = vmatpush1.msra.mxu0 0.0
    %626 = vmatprep.subr.mxu0 0.0
    %627 = vmatpush1.msra.mxu0 0.0
    %628 = vmatprep.subr.mxu0 0.0
    %629 = vmatpush1.msra.mxu0 0.0
    %630 = vmatprep.subr.mxu0 0.0
    %631 = vmatpush1.msra.mxu0 0.0
    %632 = vmatprep.subr.mxu0 0.0
    %633 = vmatpush1.msra.mxu0 0.0
    %634 = vmatprep.subr.mxu0 0.0
    %635 = vmatpush1.msra.mxu0 0.0
    %636 = vmatprep.subr.mxu0 0.0
    %637 = vmatpush1.msra.mxu0 0.0
    %638 = vmatprep.subr.mxu0 0.0
    %639 = vmatpush1.msra.mxu0 0.0
    %640 = vmatprep.subr.mxu0 0.0
    %641 = vmatpush1.msra.mxu0 0.0
    %642 = vmatprep.subr.mxu0 0.0
    %643 = vmatpush1.msra.mxu0 0.0
    %644 = vmatprep.subr.mxu0 0.0
    %645 = vmatpush1.msra.mxu0 0.0
    %646 = vmatprep.subr.mxu0 0.0
    %647 = vmatpush1.msra.mxu0 0.0
    %648 = vmatprep.subr.mxu0 0.0
    %649 = vmatpush1.msra.mxu0 0.0
    %650 = vmatprep.subr.mxu0 0.0
    %651 = vmatpush1.msra.mxu0 0.0
    %652 = vmatprep.subr.mxu0 0.0
    %653 = vmatpush1.msra.mxu0 0.0
    %654 = vmatprep.subr.mxu0 0.0
    %655 = vmatpush1.msra.mxu0 0.0
    %656 = vmatprep.subr.mxu0 0.0
    %657 = vmatpush1.msra.mxu0 0.0
    %658 = vmatprep.subr.mxu0 0.0
    %659 = vmatpush1.msra.mxu0 0.0
    %660 = vmatprep.subr.mxu0 0.0
    %661 = vmatpush1.msra.mxu0 0.0
    %662 = vmatprep.subr.mxu0 0.0
    %663 = vmatpush1.msra.mxu0 0.0
    %664 = vmatprep.subr.mxu0 0.0
    %665 = vmatpush1.msra.mxu0 0.0
    %666 = vmatprep.subr.mxu0 0.0
    %667 = vmatpush1.msra.mxu0 0.0
    %668 = vmatprep.mubr.f32.mxu0 0.0
    %669 = vmatmul.mubr.f32.gmra.mrb[0].mxu0 %v602
    %v670 = vpop.f32.mrb[0].mxu0
    %v671 = vadd.f32 0.0, %v670
    %v672 = vpop.f32.mrb[0].mxu0
    %673 = vdwg.mxu0
    %v675 = vrot.slane %v671, 5
    %v676 = vrot.slane %v671, 6
    %v679 = vadd.f32 %v137, %v675
    %v680 = vadd.f32 %v142, %v676
    %v681 = vxor.u32 %v679, 2147483648
    %v682 = vxor.u32 %v680, 2147483648
    %v683 = vmul.f32 %v681, 1.442695
    %v684 = vpow.pop %v683
    %v685 = vmul.f32 %v682, 1.442695
    %v686 = vpow.pop %v685
    %v687 = vadd.f32 %v684, 1.0
    %v688 = vadd.f32 %v686, 1.0
    %v689 = vrcp.pop %v687
    %v690 = vmul.f32 1.0, %v689
    %v691 = vrcp.pop %v688
    %v692 = vmul.f32 1.0, %v691
    %v693 = vtanh.pop %v679
    %v694 = vtanh.pop %v680
    %v697 = vrot.slane %v568, 7
    %v698 = vrot.slane %v569, 7
    %v701 = vmul.f32 %v690, %v697
    %v702 = vmul.f32 %v692, %v698
    %705 = vrot.lane.b32.xlu0 %v693, 64
    %v706 = vpop.permute.xlu0 %705
    %707 = vrot.lane.b32.xlu0 %v694, 64
    %v708 = vpop.permute.xlu0 %707
    %v711 = vmul.f32 %v690, %v706
    %v712 = vmul.f32 %v692, %v708
    %715 = vrot.lane.b32.xlu0 %v711, 32
    %v716 = vpop.permute.xlu0 %715
    %717 = vrot.lane.b32.xlu0 %v712, 32
    %v718 = vpop.permute.xlu0 %717
    %v721 = vadd.f32 %v701, %v716
    %v722 = vadd.f32 %v702, %v718
    %v723 = vtanh.pop %v721
    %v724 = vtanh.pop %v722
    %727 = vrot.lane.b32.xlu0 %v723, 64
    %v728 = vpop.permute.xlu0 %727
    %729 = vrot.lane.b32.xlu0 %v724, 64
    %v730 = vpop.permute.xlu0 %729
    %v733 = vmul.f32 %v690, %v728
    %v734 = vmul.f32 %v692, %v730
    %vm735 = vcmp.eq.s32.totalorder %v150, 3
    %v736 = vsel %vm735, 1, 0
    %vm737 = vcmp.eq.s32.totalorder %v736, 1
    %v738 = vlaneseq
    %v739 = vshrl.u32 %v738, 7
    %v740 = vsub.s32 3, %v739
    %v741 = vrot.slane %v733, %v740
    %v742 = vlaneseq
    %v743 = vshrl.u32 %v742, 7
    %v744 = vsub.s32 3, %v743
    %v745 = vrot.slane %v734, %v744
    %v746 = vsel %vm737, %v741, %v593
    %v747 = vsel %vm737, %v745, %v594
    %v750 = vrot.slane %v733, 3
    %v751 = vrot.slane %v734, 2
    %v752 = vsel %vm294, %v751, %v750
    %753 = vrot.lane.b32.xlu0 %v752, 32
    %v754 = vpop.permute.xlu0 %753
    %v755 = vsel %vm63, %v754, 0
    %757 = vmatprep.subr.mxu0 0.0
    %758 = vmatpush1.msra.mxu0 %v145
    %759 = vmatprep.subr.mxu0 0.0
    %760 = vmatpush1.msra.mxu0 %v146
    %761 = vmatprep.subr.mxu0 0.0
    %762 = vmatpush1.msra.mxu0 %v147
    %763 = vmatprep.subr.mxu0 0.0
    %764 = vmatpush1.msra.mxu0 %v148
    %765 = vmatprep.subr.mxu0 0.0
    %766 = vmatpush1.msra.mxu0 0.0
    %767 = vmatprep.subr.mxu0 0.0
    %768 = vmatpush1.msra.mxu0 0.0
    %769 = vmatprep.subr.mxu0 0.0
    %770 = vmatpush1.msra.mxu0 0.0
    %771 = vmatprep.subr.mxu0 0.0
    %772 = vmatpush1.msra.mxu0 0.0
    %773 = vmatprep.subr.mxu0 0.0
    %774 = vmatpush1.msra.mxu0 0.0
    %775 = vmatprep.subr.mxu0 0.0
    %776 = vmatpush1.msra.mxu0 0.0
    %777 = vmatprep.subr.mxu0 0.0
    %778 = vmatpush1.msra.mxu0 0.0
    %779 = vmatprep.subr.mxu0 0.0
    %780 = vmatpush1.msra.mxu0 0.0
    %781 = vmatprep.subr.mxu0 0.0
    %782 = vmatpush1.msra.mxu0 0.0
    %783 = vmatprep.subr.mxu0 0.0
    %784 = vmatpush1.msra.mxu0 0.0
    %785 = vmatprep.subr.mxu0 0.0
    %786 = vmatpush1.msra.mxu0 0.0
    %787 = vmatprep.subr.mxu0 0.0
    %788 = vmatpush1.msra.mxu0 0.0
    %789 = vmatprep.subr.mxu0 0.0
    %790 = vmatpush1.msra.mxu0 0.0
    %791 = vmatprep.subr.mxu0 0.0
    %792 = vmatpush1.msra.mxu0 0.0
    %793 = vmatprep.subr.mxu0 0.0
    %794 = vmatpush1.msra.mxu0 0.0
    %795 = vmatprep.subr.mxu0 0.0
    %796 = vmatpush1.msra.mxu0 0.0
    %797 = vmatprep.subr.mxu0 0.0
    %798 = vmatpush1.msra.mxu0 0.0
    %799 = vmatprep.subr.mxu0 0.0
    %800 = vmatpush1.msra.mxu0 0.0
    %801 = vmatprep.subr.mxu0 0.0
    %802 = vmatpush1.msra.mxu0 0.0
    %803 = vmatprep.subr.mxu0 0.0
    %804 = vmatpush1.msra.mxu0 0.0
    %805 = vmatprep.subr.mxu0 0.0
    %806 = vmatpush1.msra.mxu0 0.0
    %807 = vmatprep.subr.mxu0 0.0
    %808 = vmatpush1.msra.mxu0 0.0
    %809 = vmatprep.subr.mxu0 0.0
    %810 = vmatpush1.msra.mxu0 0.0
    %811 = vmatprep.subr.mxu0 0.0
    %812 = vmatpush1.msra.mxu0 0.0
    %813 = vmatprep.subr.mxu0 0.0
    %814 = vmatpush1.msra.mxu0 0.0
    %815 = vmatprep.subr.mxu0 0.0
    %816 = vmatpush1.msra.mxu0 0.0
    %817 = vmatprep.subr.mxu0 0.0
    %818 = vmatpush1.msra.mxu0 0.0
    %819 = vmatprep.subr.mxu0 0.0
    %820 = vmatpush1.msra.mxu0 0.0
    %821 = vmatprep.mubr.f32.mxu0 0.0
    %822 = vmatmul.mubr.f32.gmra.mrb[0].mxu0 %v755
    %v823 = vpop.f32.mrb[0].mxu0
    %v824 = vadd.f32 0.0, %v823
    %v825 = vpop.f32.mrb[0].mxu0
    %826 = vdwg.mxu0
    %v828 = vrot.slane %v824, 4
    %v829 = vrot.slane %v824, 5
    %v832 = vadd.f32 %v137, %v828
    %v833 = vadd.f32 %v142, %v829
    %v834 = vxor.u32 %v832, 2147483648
    %v835 = vxor.u32 %v833, 2147483648
    %v836 = vmul.f32 %v834, 1.442695
    %v837 = vpow.pop %v836
    %v838 = vmul.f32 %v835, 1.442695
    %v839 = vpow.pop %v838
    %v840 = vadd.f32 %v837, 1.0
    %v841 = vadd.f32 %v839, 1.0
    %v842 = vrcp.pop %v840
    %v843 = vmul.f32 1.0, %v842
    %v844 = vrcp.pop %v841
    %v845 = vmul.f32 1.0, %v844
    %v846 = vtanh.pop %v832
    %v847 = vtanh.pop %v833
    %v850 = vrot.slane %v721, 7
    %v851 = vrot.slane %v722, 7
    %v854 = vmul.f32 %v843, %v850
    %v855 = vmul.f32 %v845, %v851
    %858 = vrot.lane.b32.xlu0 %v846, 64
    %v859 = vpop.permute.xlu0 %858
    %860 = vrot.lane.b32.xlu0 %v847, 64
    %v861 = vpop.permute.xlu0 %860
    %v864 = vmul.f32 %v843, %v859
    %v865 = vmul.f32 %v845, %v861
    %868 = vrot.lane.b32.xlu0 %v864, 32
    %v869 = vpop.permute.xlu0 %868
    %870 = vrot.lane.b32.xlu0 %v865, 32
    %v871 = vpop.permute.xlu0 %870
    %v874 = vadd.f32 %v854, %v869
    %v875 = vadd.f32 %v855, %v871
    %v876 = vtanh.pop %v874
    %v877 = vtanh.pop %v875
    %880 = vrot.lane.b32.xlu0 %v876, 64
    %v881 = vpop.permute.xlu0 %880
    %882 = vrot.lane.b32.xlu0 %v877, 64
    %v883 = vpop.permute.xlu0 %882
    %v886 = vmul.f32 %v843, %v881
    %v887 = vmul.f32 %v845, %v883
    %vm888 = vcmp.eq.s32.totalorder %v150, 4
    %v889 = vsel %vm888, 1, 0
    %vm890 = vcmp.eq.s32.totalorder %v889, 1
    %v891 = vlaneseq
    %v892 = vshrl.u32 %v891, 7
    %v893 = vsub.s32 4, %v892
    %v894 = vrot.slane %v886, %v893
    %v895 = vlaneseq
    %v896 = vshrl.u32 %v895, 7
    %v897 = vsub.s32 4, %v896
    %v898 = vrot.slane %v887, %v897
    %v899 = vsel %vm890, %v894, %v746
    %v900 = vsel %vm890, %v898, %v747
    %v903 = vrot.slane %v886, 4
    %v904 = vrot.slane %v887, 3
    %v905 = vsel %vm294, %v904, %v903
    %906 = vrot.lane.b32.xlu0 %v905, 32
    %v907 = vpop.permute.xlu0 %906
    %v908 = vsel %vm63, %v907, 0
    %910 = vmatprep.subr.mxu0 0.0
    %911 = vmatpush1.msra.mxu0 %v145
    %912 = vmatprep.subr.mxu0 0.0
    %913 = vmatpush1.msra.mxu0 %v146
    %914 = vmatprep.subr.mxu0 0.0
    %915 = vmatpush1.msra.mxu0 %v147
    %916 = vmatprep.subr.mxu0 0.0
    %917 = vmatpush1.msra.mxu0 %v148
    %918 = vmatprep.subr.mxu0 0.0
    %919 = vmatpush1.msra.mxu0 0.0
    %920 = vmatprep.subr.mxu0 0.0
    %921 = vmatpush1.msra.mxu0 0.0
    %922 = vmatprep.subr.mxu0 0.0
    %923 = vmatpush1.msra.mxu0 0.0
    %924 = vmatprep.subr.mxu0 0.0
    %925 = vmatpush1.msra.mxu0 0.0
    %926 = vmatprep.subr.mxu0 0.0
    %927 = vmatpush1.msra.mxu0 0.0
    %928 = vmatprep.subr.mxu0 0.0
    %929 = vmatpush1.msra.mxu0 0.0
    %930 = vmatprep.subr.mxu0 0.0
    %931 = vmatpush1.msra.mxu0 0.0
    %932 = vmatprep.subr.mxu0 0.0
    %933 = vmatpush1.msra.mxu0 0.0
    %934 = vmatprep.subr.mxu0 0.0
    %935 = vmatpush1.msra.mxu0 0.0
    %936 = vmatprep.subr.mxu0 0.0
    %937 = vmatpush1.msra.mxu0 0.0
    %938 = vmatprep.subr.mxu0 0.0
    %939 = vmatpush1.msra.mxu0 0.0
    %940 = vmatprep.subr.mxu0 0.0
    %941 = vmatpush1.msra.mxu0 0.0
    %942 = vmatprep.subr.mxu0 0.0
    %943 = vmatpush1.msra.mxu0 0.0
    %944 = vmatprep.subr.mxu0 0.0
    %945 = vmatpush1.msra.mxu0 0.0
    %946 = vmatprep.subr.mxu0 0.0
    %947 = vmatpush1.msra.mxu0 0.0
    %948 = vmatprep.subr.mxu0 0.0
    %949 = vmatpush1.msra.mxu0 0.0
    %950 = vmatprep.subr.mxu0 0.0
    %951 = vmatpush1.msra.mxu0 0.0
    %952 = vmatprep.subr.mxu0 0.0
    %953 = vmatpush1.msra.mxu0 0.0
    %954 = vmatprep.subr.mxu0 0.0
    %955 = vmatpush1.msra.mxu0 0.0
    %956 = vmatprep.subr.mxu0 0.0
    %957 = vmatpush1.msra.mxu0 0.0
    %958 = vmatprep.subr.mxu0 0.0
    %959 = vmatpush1.msra.mxu0 0.0
    %960 = vmatprep.subr.mxu0 0.0
    %961 = vmatpush1.msra.mxu0 0.0
    %962 = vmatprep.subr.mxu0 0.0
    %963 = vmatpush1.msra.mxu0 0.0
    %964 = vmatprep.subr.mxu0 0.0
    %965 = vmatpush1.msra.mxu0 0.0
    %966 = vmatprep.subr.mxu0 0.0
    %967 = vmatpush1.msra.mxu0 0.0
    %968 = vmatprep.subr.mxu0 0.0
    %969 = vmatpush1.msra.mxu0 0.0
    %970 = vmatprep.subr.mxu0 0.0
    %971 = vmatpush1.msra.mxu0 0.0
    %972 = vmatprep.subr.mxu0 0.0
    %973 = vmatpush1.msra.mxu0 0.0
    %974 = vmatprep.mubr.f32.mxu0 0.0
    %975 = vmatmul.mubr.f32.gmra.mrb[0].mxu0 %v908
    %v976 = vpop.f32.mrb[0].mxu0
    %v977 = vadd.f32 0.0, %v976
    %v978 = vpop.f32.mrb[0].mxu0
    %979 = vdwg.mxu0
    %v981 = vrot.slane %v977, 3
    %v982 = vrot.slane %v977, 4
    %v985 = vadd.f32 %v137, %v981
    %v986 = vadd.f32 %v142, %v982
    %v987 = vxor.u32 %v985, 2147483648
    %v988 = vxor.u32 %v986, 2147483648
    %v989 = vmul.f32 %v987, 1.442695
    %v990 = vpow.pop %v989
    %v991 = vmul.f32 %v988, 1.442695
    %v992 = vpow.pop %v991
    %v993 = vadd.f32 %v990, 1.0
    %v994 = vadd.f32 %v992, 1.0
    %v995 = vrcp.pop %v993
    %v996 = vmul.f32 1.0, %v995
    %v997 = vrcp.pop %v994
    %v998 = vmul.f32 1.0, %v997
    %v999 = vtanh.pop %v985
    %v1000 = vtanh.pop %v986
    %v1003 = vrot.slane %v874, 7
    %v1004 = vrot.slane %v875, 7
    %v1007 = vmul.f32 %v996, %v1003
    %v1008 = vmul.f32 %v998, %v1004
    %1011 = vrot.lane.b32.xlu0 %v999, 64
    %v1012 = vpop.permute.xlu0 %1011
    %1013 = vrot.lane.b32.xlu0 %v1000, 64
    %v1014 = vpop.permute.xlu0 %1013
    %v1017 = vmul.f32 %v996, %v1012
    %v1018 = vmul.f32 %v998, %v1014
    %1021 = vrot.lane.b32.xlu0 %v1017, 32
    %v1022 = vpop.permute.xlu0 %1021
    %1023 = vrot.lane.b32.xlu0 %v1018, 32
    %v1024 = vpop.permute.xlu0 %1023
    %v1027 = vadd.f32 %v1007, %v1022
    %v1028 = vadd.f32 %v1008, %v1024
    %v1029 = vtanh.pop %v1027
    %v1030 = vtanh.pop %v1028
    %1033 = vrot.lane.b32.xlu0 %v1029, 64
    %v1034 = vpop.permute.xlu0 %1033
    %1035 = vrot.lane.b32.xlu0 %v1030, 64
    %v1036 = vpop.permute.xlu0 %1035
    %v1039 = vmul.f32 %v996, %v1034
    %v1040 = vmul.f32 %v998, %v1036
    %vm1041 = vcmp.eq.s32.totalorder %v150, 5
    %v1042 = vsel %vm1041, 1, 0
    %vm1043 = vcmp.eq.s32.totalorder %v1042, 1
    %v1044 = vlaneseq
    %v1045 = vshrl.u32 %v1044, 7
    %v1046 = vsub.s32 5, %v1045
    %v1047 = vrot.slane %v1039, %v1046
    %v1048 = vlaneseq
    %v1049 = vshrl.u32 %v1048, 7
    %v1050 = vsub.s32 5, %v1049
    %v1051 = vrot.slane %v1040, %v1050
    %v1052 = vsel %vm1043, %v1047, %v899
    %v1053 = vsel %vm1043, %v1051, %v900
    %v1056 = vrot.slane %v1039, 5
    %v1057 = vrot.slane %v1040, 4
    %v1058 = vsel %vm294, %v1057, %v1056
    %1059 = vrot.lane.b32.xlu0 %v1058, 32
    %v1060 = vpop.permute.xlu0 %1059
    %v1061 = vsel %vm63, %v1060, 0
    %1063 = vmatprep.subr.mxu0 0.0
    %1064 = vmatpush1.msra.mxu0 %v145
    %1065 = vmatprep.subr.mxu0 0.0
    %1066 = vmatpush1.msra.mxu0 %v146
    %1067 = vmatprep.subr.mxu0 0.0
    %1068 = vmatpush1.msra.mxu0 %v147
    %1069 = vmatprep.subr.mxu0 0.0
    %1070 = vmatpush1.msra.mxu0 %v148
    %1071 = vmatprep.subr.mxu0 0.0
    %1072 = vmatpush1.msra.mxu0 0.0
    %1073 = vmatprep.subr.mxu0 0.0
    %1074 = vmatpush1.msra.mxu0 0.0
    %1075 = vmatprep.subr.mxu0 0.0
    %1076 = vmatpush1.msra.mxu0 0.0
    %1077 = vmatprep.subr.mxu0 0.0
    %1078 = vmatpush1.msra.mxu0 0.0
    %1079 = vmatprep.subr.mxu0 0.0
    %1080 = vmatpush1.msra.mxu0 0.0
    %1081 = vmatprep.subr.mxu0 0.0
    %1082 = vmatpush1.msra.mxu0 0.0
    %1083 = vmatprep.subr.mxu0 0.0
    %1084 = vmatpush1.msra.mxu0 0.0
    %1085 = vmatprep.subr.mxu0 0.0
    %1086 = vmatpush1.msra.mxu0 0.0
    %1087 = vmatprep.subr.mxu0 0.0
    %1088 = vmatpush1.msra.mxu0 0.0
    %1089 = vmatprep.subr.mxu0 0.0
    %1090 = vmatpush1.msra.mxu0 0.0
    %1091 = vmatprep.subr.mxu0 0.0
    %1092 = vmatpush1.msra.mxu0 0.0
    %1093 = vmatprep.subr.mxu0 0.0
    %1094 = vmatpush1.msra.mxu0 0.0
    %1095 = vmatprep.subr.mxu0 0.0
    %1096 = vmatpush1.msra.mxu0 0.0
    %1097 = vmatprep.subr.mxu0 0.0
    %1098 = vmatpush1.msra.mxu0 0.0
    %1099 = vmatprep.subr.mxu0 0.0
    %1100 = vmatpush1.msra.mxu0 0.0
    %1101 = vmatprep.subr.mxu0 0.0
    %1102 = vmatpush1.msra.mxu0 0.0
    %1103 = vmatprep.subr.mxu0 0.0
    %1104 = vmatpush1.msra.mxu0 0.0
    %1105 = vmatprep.subr.mxu0 0.0
    %1106 = vmatpush1.msra.mxu0 0.0
    %1107 = vmatprep.subr.mxu0 0.0
    %1108 = vmatpush1.msra.mxu0 0.0
    %1109 = vmatprep.subr.mxu0 0.0
    %1110 = vmatpush1.msra.mxu0 0.0
    %1111 = vmatprep.subr.mxu0 0.0
    %1112 = vmatpush1.msra.mxu0 0.0
    %1113 = vmatprep.subr.mxu0 0.0
    %1114 = vmatpush1.msra.mxu0 0.0
    %1115 = vmatprep.subr.mxu0 0.0
    %1116 = vmatpush1.msra.mxu0 0.0
    %1117 = vmatprep.subr.mxu0 0.0
    %1118 = vmatpush1.msra.mxu0 0.0
    %1119 = vmatprep.subr.mxu0 0.0
    %1120 = vmatpush1.msra.mxu0 0.0
    %1121 = vmatprep.subr.mxu0 0.0
    %1122 = vmatpush1.msra.mxu0 0.0
    %1123 = vmatprep.subr.mxu0 0.0
    %1124 = vmatpush1.msra.mxu0 0.0
    %1125 = vmatprep.subr.mxu0 0.0
    %1126 = vmatpush1.msra.mxu0 0.0
    %1127 = vmatprep.mubr.f32.mxu0 0.0
    %1128 = vmatmul.mubr.f32.gmra.mrb[0].mxu0 %v1061
    %v1129 = vpop.f32.mrb[0].mxu0
    %v1130 = vadd.f32 0.0, %v1129
    %v1131 = vpop.f32.mrb[0].mxu0
    %1132 = vdwg.mxu0
    %v1134 = vrot.slane %v1130, 2
    %v1135 = vrot.slane %v1130, 3
    %v1138 = vadd.f32 %v137, %v1134
    %v1139 = vadd.f32 %v142, %v1135
    %v1140 = vxor.u32 %v1138, 2147483648
    %v1141 = vxor.u32 %v1139, 2147483648
    %v1142 = vmul.f32 %v1140, 1.442695
    %v1143 = vpow.pop %v1142
    %v1144 = vmul.f32 %v1141, 1.442695
    %v1145 = vpow.pop %v1144
    %v1146 = vadd.f32 %v1143, 1.0
    %v1147 = vadd.f32 %v1145, 1.0
    %v1148 = vrcp.pop %v1146
    %v1149 = vmul.f32 1.0, %v1148
    %v1150 = vrcp.pop %v1147
    %v1151 = vmul.f32 1.0, %v1150
    %v1152 = vtanh.pop %v1138
    %v1153 = vtanh.pop %v1139
    %v1156 = vrot.slane %v1027, 7
    %v1157 = vrot.slane %v1028, 7
    %v1160 = vmul.f32 %v1149, %v1156
    %v1161 = vmul.f32 %v1151, %v1157
    %1164 = vrot.lane.b32.xlu0 %v1152, 64
    %v1165 = vpop.permute.xlu0 %1164
    %1166 = vrot.lane.b32.xlu0 %v1153, 64
    %v1167 = vpop.permute.xlu0 %1166
    %v1170 = vmul.f32 %v1149, %v1165
    %v1171 = vmul.f32 %v1151, %v1167
    %1174 = vrot.lane.b32.xlu0 %v1170, 32
    %v1175 = vpop.permute.xlu0 %1174
    %1176 = vrot.lane.b32.xlu0 %v1171, 32
    %v1177 = vpop.permute.xlu0 %1176
    %v1180 = vadd.f32 %v1160, %v1175
    %v1181 = vadd.f32 %v1161, %v1177
    %v1182 = vtanh.pop %v1180
    %v1183 = vtanh.pop %v1181
    %1186 = vrot.lane.b32.xlu0 %v1182, 64
    %v1187 = vpop.permute.xlu0 %1186
    %1188 = vrot.lane.b32.xlu0 %v1183, 64
    %v1189 = vpop.permute.xlu0 %1188
    %v1192 = vmul.f32 %v1149, %v1187
    %v1193 = vmul.f32 %v1151, %v1189
    %vm1194 = vcmp.eq.s32.totalorder %v150, 6
    %v1195 = vsel %vm1194, 1, 0
    %vm1196 = vcmp.eq.s32.totalorder %v1195, 1
    %v1197 = vlaneseq
    %v1198 = vshrl.u32 %v1197, 7
    %v1199 = vsub.s32 6, %v1198
    %v1200 = vrot.slane %v1192, %v1199
    %v1201 = vlaneseq
    %v1202 = vshrl.u32 %v1201, 7
    %v1203 = vsub.s32 6, %v1202
    %v1204 = vrot.slane %v1193, %v1203
    %v1205 = vsel %vm1196, %v1200, %v1052
    %v1206 = vsel %vm1196, %v1204, %v1053
    %v1209 = vrot.slane %v1192, 6
    %v1210 = vrot.slane %v1193, 5
    %v1211 = vsel %vm294, %v1210, %v1209
    %1212 = vrot.lane.b32.xlu0 %v1211, 32
    %v1213 = vpop.permute.xlu0 %1212
    %v1214 = vsel %vm63, %v1213, 0
    %1216 = vmatprep.subr.mxu0 0.0
    %1217 = vmatpush1.msra.mxu0 %v145
    %1218 = vmatprep.subr.mxu0 0.0
    %1219 = vmatpush1.msra.mxu0 %v146
    %1220 = vmatprep.subr.mxu0 0.0
    %1221 = vmatpush1.msra.mxu0 %v147
    %1222 = vmatprep.subr.mxu0 0.0
    %1223 = vmatpush1.msra.mxu0 %v148
    %1224 = vmatprep.subr.mxu0 0.0
    %1225 = vmatpush1.msra.mxu0 0.0
    %1226 = vmatprep.subr.mxu0 0.0
    %1227 = vmatpush1.msra.mxu0 0.0
    %1228 = vmatprep.subr.mxu0 0.0
    %1229 = vmatpush1.msra.mxu0 0.0
    %1230 = vmatprep.subr.mxu0 0.0
    %1231 = vmatpush1.msra.mxu0 0.0
    %1232 = vmatprep.subr.mxu0 0.0
    %1233 = vmatpush1.msra.mxu0 0.0
    %1234 = vmatprep.subr.mxu0 0.0
    %1235 = vmatpush1.msra.mxu0 0.0
    %1236 = vmatprep.subr.mxu0 0.0
    %1237 = vmatpush1.msra.mxu0 0.0
    %1238 = vmatprep.subr.mxu0 0.0
    %1239 = vmatpush1.msra.mxu0 0.0
    %1240 = vmatprep.subr.mxu0 0.0
    %1241 = vmatpush1.msra.mxu0 0.0
    %1242 = vmatprep.subr.mxu0 0.0
    %1243 = vmatpush1.msra.mxu0 0.0
    %1244 = vmatprep.subr.mxu0 0.0
    %1245 = vmatpush1.msra.mxu0 0.0
    %1246 = vmatprep.subr.mxu0 0.0
    %1247 = vmatpush1.msra.mxu0 0.0
    %1248 = vmatprep.subr.mxu0 0.0
    %1249 = vmatpush1.msra.mxu0 0.0
    %1250 = vmatprep.subr.mxu0 0.0
    %1251 = vmatpush1.msra.mxu0 0.0
    %1252 = vmatprep.subr.mxu0 0.0
    %1253 = vmatpush1.msra.mxu0 0.0
    %1254 = vmatprep.subr.mxu0 0.0
    %1255 = vmatpush1.msra.mxu0 0.0
    %1256 = vmatprep.subr.mxu0 0.0
    %1257 = vmatpush1.msra.mxu0 0.0
    %1258 = vmatprep.subr.mxu0 0.0
    %1259 = vmatpush1.msra.mxu0 0.0
    %1260 = vmatprep.subr.mxu0 0.0
    %1261 = vmatpush1.msra.mxu0 0.0
    %1262 = vmatprep.subr.mxu0 0.0
    %1263 = vmatpush1.msra.mxu0 0.0
    %1264 = vmatprep.subr.mxu0 0.0
    %1265 = vmatpush1.msra.mxu0 0.0
    %1266 = vmatprep.subr.mxu0 0.0
    %1267 = vmatpush1.msra.mxu0 0.0
    %1268 = vmatprep.subr.mxu0 0.0
    %1269 = vmatpush1.msra.mxu0 0.0
    %1270 = vmatprep.subr.mxu0 0.0
    %1271 = vmatpush1.msra.mxu0 0.0
    %1272 = vmatprep.subr.mxu0 0.0
    %1273 = vmatpush1.msra.mxu0 0.0
    %1274 = vmatprep.subr.mxu0 0.0
    %1275 = vmatpush1.msra.mxu0 0.0
    %1276 = vmatprep.subr.mxu0 0.0
    %1277 = vmatpush1.msra.mxu0 0.0
    %1278 = vmatprep.subr.mxu0 0.0
    %1279 = vmatpush1.msra.mxu0 0.0
    %1280 = vmatprep.mubr.f32.mxu0 0.0
    %1281 = vmatmul.mubr.f32.gmra.mrb[0].mxu0 %v1214
    %v1282 = vpop.f32.mrb[0].mxu0
    %v1283 = vadd.f32 0.0, %v1282
    %v1284 = vpop.f32.mrb[0].mxu0
    %1285 = vdwg.mxu0
    %v1287 = vrot.slane %v1283, 1
    %v1288 = vrot.slane %v1283, 2
    %v1291 = vadd.f32 %v137, %v1287
    %v1292 = vadd.f32 %v142, %v1288
    %v1293 = vxor.u32 %v1291, 2147483648
    %v1294 = vxor.u32 %v1292, 2147483648
    %v1295 = vmul.f32 %v1293, 1.442695
    %v1296 = vpow.pop %v1295
    %v1297 = vmul.f32 %v1294, 1.442695
    %v1298 = vpow.pop %v1297
    %v1299 = vadd.f32 %v1296, 1.0
    %v1300 = vadd.f32 %v1298, 1.0
    %v1301 = vrcp.pop %v1299
    %v1302 = vmul.f32 1.0, %v1301
    %v1303 = vrcp.pop %v1300
    %v1304 = vmul.f32 1.0, %v1303
    %v1305 = vtanh.pop %v1291
    %v1306 = vtanh.pop %v1292
    %v1309 = vrot.slane %v1180, 7
    %v1310 = vrot.slane %v1181, 7
    %v1313 = vmul.f32 %v1302, %v1309
    %v1314 = vmul.f32 %v1304, %v1310
    %1317 = vrot.lane.b32.xlu0 %v1305, 64
    %v1318 = vpop.permute.xlu0 %1317
    %1319 = vrot.lane.b32.xlu0 %v1306, 64
    %v1320 = vpop.permute.xlu0 %1319
    %v1323 = vmul.f32 %v1302, %v1318
    %v1324 = vmul.f32 %v1304, %v1320
    %1327 = vrot.lane.b32.xlu0 %v1323, 32
    %v1328 = vpop.permute.xlu0 %1327
    %1329 = vrot.lane.b32.xlu0 %v1324, 32
    %v1330 = vpop.permute.xlu0 %1329
    %v1333 = vadd.f32 %v1313, %v1328
    %v1334 = vadd.f32 %v1314, %v1330
    %v1335 = vtanh.pop %v1333
    %v1336 = vtanh.pop %v1334
    %1339 = vrot.lane.b32.xlu0 %v1335, 64
    %v1340 = vpop.permute.xlu0 %1339
    %1341 = vrot.lane.b32.xlu0 %v1336, 64
    %v1342 = vpop.permute.xlu0 %1341
    %v1345 = vmul.f32 %v1302, %v1340
    %v1346 = vmul.f32 %v1304, %v1342
    %vm1347 = vcmp.eq.s32.totalorder %v150, 7
    %v1348 = vsel %vm1347, 1, 0
    %vm1349 = vcmp.eq.s32.totalorder %v1348, 1
    %v1350 = vlaneseq
    %v1351 = vshrl.u32 %v1350, 7
    %v1352 = vsub.s32 7, %v1351
    %v1353 = vrot.slane %v1345, %v1352
    %v1354 = vlaneseq
    %v1355 = vshrl.u32 %v1354, 7
    %v1356 = vsub.s32 7, %v1355
    %v1357 = vrot.slane %v1346, %v1356
    %v1358 = vsel %vm1349, %v1353, %v1205
    %v1359 = vsel %vm1349, %v1357, %v1206
    %v1360 = vld [vmem:[%s2] sm:$0x3]
    %vm1361 = vcmask 58368
    %v1362 = vsel %vm1361, %v1360, 0.0
    %1363 = vadd.xlane.f32.xlu0 %v1362
    %v1364 = vpop.xlane.xlu0 %1363
    %v1365 = vlaneseq
    %v1366 = vand.u32 %v1365, 127
    %v1367 = vcvt.s32.f32 %v1366
    %vm1368 = vcmp.lt.f32.partialorder %v1367, %v1364
    %v1369 = vsel %vm1368, 1, 0
    %v1370 = vcvt.s32.f32 %v1369
    %v1371 = vlaneseq
    %v1372 = vshrl.u32 %v1371, 7
    %v1373 = vsub.s32 0, %v1372
    %v1374 = vrot.slane %v1370, %v1373
    %1376 = vbcast.lane.b32.xlu0 %v1374, 256
    %v1377 = vpop.permute.xlu0 %1376
    %v1378 = vlaneseq
    %v1379 = vshrl.u32 %v1378, 7
    %v1380 = vsub.s32 1, %v1379
    %v1381 = vrot.slane %v1370, %v1380
    %1383 = vbcast.lane.b32.xlu0 %v1381, 256
    %v1384 = vpop.permute.xlu0 %1383
    %v1385 = vmul.f32 %v1358, %v1377
    %v1386 = vmul.f32 %v1359, %v1384
    %v1387 = vld [vmem:[%s6] sm:$0xff]
    %v1388 = vld [vmem:[%s6 + $0x8] sm:$0xff]
    %v1389 = vld [vmem:[%s6 + $0x10] sm:$0xff]
    %v1390 = vld [vmem:[%s6 + $0x18] sm:$0xff]
    %1393 = vrot.lane.b32.xlu0 %v1385, 32
    %v1394 = vpop.permute.xlu0 %1393
    %1395 = vrot.lane.b32.xlu0 %v1386, 32
    %v1396 = vpop.permute.xlu0 %1395
    %v1397 = vsel %vm63, %v1394, 0
    %v1399 = vsel %vm63, %v1396, 0
    %1401 = vmatprep.subr.mxu0 0.0
    %1402 = vmatpush1.msra.mxu0 %v1387
    %1403 = vmatprep.subr.mxu0 0.0
    %1404 = vmatpush1.msra.mxu0 %v1388
    %1405 = vmatprep.subr.mxu0 0.0
    %1406 = vmatpush1.msra.mxu0 %v1389
    %1407 = vmatprep.subr.mxu0 0.0
    %1408 = vmatpush1.msra.mxu0 %v1390
    %1409 = vmatprep.subr.mxu0 0.0
    %1410 = vmatpush1.msra.mxu0 0.0
    %1411 = vmatprep.subr.mxu0 0.0
    %1412 = vmatpush1.msra.mxu0 0.0
    %1413 = vmatprep.subr.mxu0 0.0
    %1414 = vmatpush1.msra.mxu0 0.0
    %1415 = vmatprep.subr.mxu0 0.0
    %1416 = vmatpush1.msra.mxu0 0.0
    %1417 = vmatprep.subr.mxu0 0.0
    %1418 = vmatpush1.msra.mxu0 0.0
    %1419 = vmatprep.subr.mxu0 0.0
    %1420 = vmatpush1.msra.mxu0 0.0
    %1421 = vmatprep.subr.mxu0 0.0
    %1422 = vmatpush1.msra.mxu0 0.0
    %1423 = vmatprep.subr.mxu0 0.0
    %1424 = vmatpush1.msra.mxu0 0.0
    %1425 = vmatprep.subr.mxu0 0.0
    %1426 = vmatpush1.msra.mxu0 0.0
    %1427 = vmatprep.subr.mxu0 0.0
    %1428 = vmatpush1.msra.mxu0 0.0
    %1429 = vmatprep.subr.mxu0 0.0
    %1430 = vmatpush1.msra.mxu0 0.0
    %1431 = vmatprep.subr.mxu0 0.0
    %1432 = vmatpush1.msra.mxu0 0.0
    %1433 = vmatprep.subr.mxu0 0.0
    %1434 = vmatpush1.msra.mxu0 0.0
    %1435 = vmatprep.subr.mxu0 0.0
    %1436 = vmatpush1.msra.mxu0 0.0
    %1437 = vmatprep.subr.mxu0 0.0
    %1438 = vmatpush1.msra.mxu0 0.0
    %1439 = vmatprep.subr.mxu0 0.0
    %1440 = vmatpush1.msra.mxu0 0.0
    %1441 = vmatprep.subr.mxu0 0.0
    %1442 = vmatpush1.msra.mxu0 0.0
    %1443 = vmatprep.subr.mxu0 0.0
    %1444 = vmatpush1.msra.mxu0 0.0
    %1445 = vmatprep.subr.mxu0 0.0
    %1446 = vmatpush1.msra.mxu0 0.0
    %1447 = vmatprep.subr.mxu0 0.0
    %1448 = vmatpush1.msra.mxu0 0.0
    %1449 = vmatprep.subr.mxu0 0.0
    %1450 = vmatpush1.msra.mxu0 0.0
    %1451 = vmatprep.subr.mxu0 0.0
    %1452 = vmatpush1.msra.mxu0 0.0
    %1453 = vmatprep.subr.mxu0 0.0
    %1454 = vmatpush1.msra.mxu0 0.0
    %1455 = vmatprep.subr.mxu0 0.0
    %1456 = vmatpush1.msra.mxu0 0.0
    %1457 = vmatprep.subr.mxu0 0.0
    %1458 = vmatpush1.msra.mxu0 0.0
    %1459 = vmatprep.subr.mxu0 0.0
    %1460 = vmatpush1.msra.mxu0 0.0
    %1461 = vmatprep.subr.mxu0 0.0
    %1462 = vmatpush1.msra.mxu0 0.0
    %1463 = vmatprep.subr.mxu0 0.0
    %1464 = vmatpush1.msra.mxu0 0.0
    %1465 = vmatprep.mubr.f32.mxu0 0.0
    %1466 = vmatmul.mubr.f32.gmra.mrb[0].mxu0 %v1397
    %v1467 = vpop.f32.mrb[0].mxu0
    %v1468 = vadd.f32 0.0, %v1467
    %v1469 = vpop.f32.mrb[0].mxu0
    %1470 = vmatprep.mubr.f32.mxu0 0.0
    %1471 = vmatmul.mubr.f32.gmra.mrb[0].mxu0 %v1399
    %v1472 = vpop.f32.mrb[0].mxu0
    %v1473 = vadd.f32 0.0, %v1472
    %v1474 = vpop.f32.mrb[0].mxu0
    %1475 = vdwg.mxu0
    %v1476 = vld [vmem:[%s7] sm:$0xff]
    %v1477 = vld [vmem:[%s7 + $0x8] sm:$0xff]
    %v1478 = vld [vmem:[%s7 + $0x10] sm:$0xff]
    %v1479 = vld [vmem:[%s7 + $0x18] sm:$0xff]
    %v1480 = vrot.slane %v1385, 7
    %v1481 = vrot.slane %v1386, 6
    %v1482 = vsel %vm294, %v1481, %v1480
    %1483 = vrot.lane.b32.xlu0 %v1482, 32
    %v1484 = vpop.permute.xlu0 %1483
    %v1485 = vsel %vm63, %v1484, 0
    %1487 = vmatprep.subr.mxu0 0.0
    %1488 = vmatpush1.msra.mxu0 %v1476
    %1489 = vmatprep.subr.mxu0 0.0
    %1490 = vmatpush1.msra.mxu0 %v1477
    %1491 = vmatprep.subr.mxu0 0.0
    %1492 = vmatpush1.msra.mxu0 %v1478
    %1493 = vmatprep.subr.mxu0 0.0
    %1494 = vmatpush1.msra.mxu0 %v1479
    %1495 = vmatprep.subr.mxu0 0.0
    %1496 = vmatpush1.msra.mxu0 0.0
    %1497 = vmatprep.subr.mxu0 0.0
    %1498 = vmatpush1.msra.mxu0 0.0
    %1499 = vmatprep.subr.mxu0 0.0
    %1500 = vmatpush1.msra.mxu0 0.0
    %1501 = vmatprep.subr.mxu0 0.0
    %1502 = vmatpush1.msra.mxu0 0.0
    %1503 = vmatprep.subr.mxu0 0.0
    %1504 = vmatpush1.msra.mxu0 0.0
    %1505 = vmatprep.subr.mxu0 0.0
    %1506 = vmatpush1.msra.mxu0 0.0
    %1507 = vmatprep.subr.mxu0 0.0
    %1508 = vmatpush1.msra.mxu0 0.0
    %1509 = vmatprep.subr.mxu0 0.0
    %1510 = vmatpush1.msra.mxu0 0.0
    %1511 = vmatprep.subr.mxu0 0.0
    %1512 = vmatpush1.msra.mxu0 0.0
    %1513 = vmatprep.subr.mxu0 0.0
    %1514 = vmatpush1.msra.mxu0 0.0
    %1515 = vmatprep.subr.mxu0 0.0
    %1516 = vmatpush1.msra.mxu0 0.0
    %1517 = vmatprep.subr.mxu0 0.0
    %1518 = vmatpush1.msra.mxu0 0.0
    %1519 = vmatprep.subr.mxu0 0.0
    %1520 = vmatpush1.msra.mxu0 0.0
    %1521 = vmatprep.subr.mxu0 0.0
    %1522 = vmatpush1.msra.mxu0 0.0
    %1523 = vmatprep.subr.mxu0 0.0
    %1524 = vmatpush1.msra.mxu0 0.0
    %1525 = vmatprep.subr.mxu0 0.0
    %1526 = vmatpush1.msra.mxu0 0.0
    %1527 = vmatprep.subr.mxu0 0.0
    %1528 = vmatpush1.msra.mxu0 0.0
    %1529 = vmatprep.subr.mxu0 0.0
    %1530 = vmatpush1.msra.mxu0 0.0
    %1531 = vmatprep.subr.mxu0 0.0
    %1532 = vmatpush1.msra.mxu0 0.0
    %1533 = vmatprep.subr.mxu0 0.0
    %1534 = vmatpush1.msra.mxu0 0.0
    %1535 = vmatprep.subr.mxu0 0.0
    %1536 = vmatpush1.msra.mxu0 0.0
    %1537 = vmatprep.subr.mxu0 0.0
    %1538 = vmatpush1.msra.mxu0 0.0
    %1539 = vmatprep.subr.mxu0 0.0
    %1540 = vmatpush1.msra.mxu0 0.0
    %1541 = vmatprep.subr.mxu0 0.0
    %1542 = vmatpush1.msra.mxu0 0.0
    %1543 = vmatprep.subr.mxu0 0.0
    %1544 = vmatpush1.msra.mxu0 0.0
    %1545 = vmatprep.subr.mxu0 0.0
    %1546 = vmatpush1.msra.mxu0 0.0
    %1547 = vmatprep.subr.mxu0 0.0
    %1548 = vmatpush1.msra.mxu0 0.0
    %1549 = vmatprep.subr.mxu0 0.0
    %1550 = vmatpush1.msra.mxu0 0.0
    %1551 = vmatprep.mubr.f32.mxu0 0.0
    %1552 = vmatmul.mubr.f32.gmra.mrb[0].mxu0 %v1485
    %v1553 = vpop.f32.mrb[0].mxu0
    %v1554 = vadd.f32 0.0, %v1553
    %v1555 = vpop.f32.mrb[0].mxu0
    %1556 = vdwg.mxu0
    %v1557 = vld [vmem:[%s1] sm:$0xff]
    %v1558 = vld [vmem:[%s1 + $0x8] sm:$0xff]
    %v1559 = vld [vmem:[%s8] sm:$0xff]
    %v1560 = vld [vmem:[%s8 + $0x8] sm:$0xff]
    %vm1561 = vcmask 130048
    %v1563 = vsel %vm1561, %v1557, 0
    %v1566 = vsel %vm1561, %v1558, 0
    %1568 = vmatprep.subr.mxu0 0.0
    %1569 = vmatpush1.msra.mxu0 %v1559
    %1570 = vmatprep.subr.mxu0 0.0
    %1571 = vmatpush1.msra.mxu0 %v1560
    %1572 = vmatprep.subr.mxu0 0.0
    %1573 = vmatpush1.msra.mxu0 0.0
    %1574 = vmatprep.subr.mxu0 0.0
    %1575 = vmatpush1.msra.mxu0 0.0
    %1576 = vmatprep.subr.mxu0 0.0
    %1577 = vmatpush1.msra.mxu0 0.0
    %1578 = vmatprep.subr.mxu0 0.0
    %1579 = vmatpush1.msra.mxu0 0.0
    %1580 = vmatprep.subr.mxu0 0.0
    %1581 = vmatpush1.msra.mxu0 0.0
    %1582 = vmatprep.subr.mxu0 0.0
    %1583 = vmatpush1.msra.mxu0 0.0
    %1584 = vmatprep.subr.mxu0 0.0
    %1585 = vmatpush1.msra.mxu0 0.0
    %1586 = vmatprep.subr.mxu0 0.0
    %1587 = vmatpush1.msra.mxu0 0.0
    %1588 = vmatprep.subr.mxu0 0.0
    %1589 = vmatpush1.msra.mxu0 0.0
    %1590 = vmatprep.subr.mxu0 0.0
    %1591 = vmatpush1.msra.mxu0 0.0
    %1592 = vmatprep.subr.mxu0 0.0
    %1593 = vmatpush1.msra.mxu0 0.0
    %1594 = vmatprep.subr.mxu0 0.0
    %1595 = vmatpush1.msra.mxu0 0.0
    %1596 = vmatprep.subr.mxu0 0.0
    %1597 = vmatpush1.msra.mxu0 0.0
    %1598 = vmatprep.subr.mxu0 0.0
    %1599 = vmatpush1.msra.mxu0 0.0
    %1600 = vmatprep.subr.mxu0 0.0
    %1601 = vmatpush1.msra.mxu0 0.0
    %1602 = vmatprep.subr.mxu0 0.0
    %1603 = vmatpush1.msra.mxu0 0.0
    %1604 = vmatprep.subr.mxu0 0.0
    %1605 = vmatpush1.msra.mxu0 0.0
    %1606 = vmatprep.subr.mxu0 0.0
    %1607 = vmatpush1.msra.mxu0 0.0
    %1608 = vmatprep.subr.mxu0 0.0
    %1609 = vmatpush1.msra.mxu0 0.0
    %1610 = vmatprep.subr.mxu0 0.0
    %1611 = vmatpush1.msra.mxu0 0.0
    %1612 = vmatprep.subr.mxu0 0.0
    %1613 = vmatpush1.msra.mxu0 0.0
    %1614 = vmatprep.subr.mxu0 0.0
    %1615 = vmatpush1.msra.mxu0 0.0
    %1616 = vmatprep.subr.mxu0 0.0
    %1617 = vmatpush1.msra.mxu0 0.0
    %1618 = vmatprep.subr.mxu0 0.0
    %1619 = vmatpush1.msra.mxu0 0.0
    %1620 = vmatprep.subr.mxu0 0.0
    %1621 = vmatpush1.msra.mxu0 0.0
    %1622 = vmatprep.subr.mxu0 0.0
    %1623 = vmatpush1.msra.mxu0 0.0
    %1624 = vmatprep.subr.mxu0 0.0
    %1625 = vmatpush1.msra.mxu0 0.0
    %1626 = vmatprep.subr.mxu0 0.0
    %1627 = vmatpush1.msra.mxu0 0.0
    %1628 = vmatprep.subr.mxu0 0.0
    %1629 = vmatpush1.msra.mxu0 0.0
    %1630 = vmatprep.subr.mxu0 0.0
    %1631 = vmatpush1.msra.mxu0 0.0
    %1632 = vmatprep.mubr.f32.mxu0 0.0
    %1633 = vmatmul.mubr.f32.gmra.mrb[0].mxu0 %v1563
    %v1634 = vpop.f32.mrb[0].mxu0
    %v1635 = vadd.f32 0.0, %v1634
    %v1636 = vpop.f32.mrb[0].mxu0
    %1637 = vmatprep.mubr.f32.mxu0 0.0
    %1638 = vmatmul.mubr.f32.gmra.mrb[0].mxu0 %v1566
    %v1639 = vpop.f32.mrb[0].mxu0
    %v1640 = vadd.f32 0.0, %v1639
    %v1641 = vpop.f32.mrb[0].mxu0
    %1642 = vdwg.mxu0
    %v1643 = vadd.f32 %v1468, %v1635
    %v1644 = vadd.f32 %v1473, %v1640
    %v1647 = vunpack.c.l.s4 1966171168
    %v1648 = vunpack.c.0.s8 %v1647
    %v1649 = vlaneseq
    %v1650 = vshrl.u32 %v1649, 7
    %v1651 = vsub.s32 %v1648, %v1650
    %v1652 = vrot.slane %v1554, %v1651
    %v1653 = vcombine.high %v1652, %v1652
    %v1655 = vunpack.c.l.s4 1966171168
    %v1656 = vunpack.c.0.s8 %v1655
    %v1657 = vlaneseq
    %v1658 = vshrl.u32 %v1657, 7
    %v1659 = vsub.s32 %v1656, %v1658
    %v1660 = vrot.slane %v1652, %v1659
    %v1662 = vunpack.c.l.s4 1966171168
    %v1663 = vunpack.c.0.s8 %v1662
    %v1664 = vlaneseq
    %v1665 = vshrl.u32 %v1664, 7
    %v1666 = vsub.s32 %v1663, %v1665
    %v1667 = vrot.slane %v1653, %v1666
    %v1668 = vlaneseq
    %v1669 = vshrl.u32 %v1668, 7
    %v1670 = vsub.s32 0, %v1669
    %v1671 = vrot.slane %v1660, %v1670
    %v1672 = vlaneseq
    %v1673 = vshrl.u32 %v1672, 7
    %v1674 = vsub.s32 0, %v1673
    %v1675 = vrot.slane %v1667, %v1674
    %v1678 = vadd.f32 %v1643, %v1671
    %v1679 = vadd.f32 %v1644, %v1675
    %v1680 = vld [vmem:[%s10] sm:$0x1]
    %v1682 = vlaneseq
    %v1683 = vshrl.u32 %v1682, 7
    %v1684 = vsub.s32 0, %v1683
    %v1685 = vrot.slane %v1680, %v1684
    %v1687 = vadd.f32 %v1678, %v1685
    %v1688 = vadd.f32 %v1679, %v1685
    %v1689 = vtanh.pop %v1687
    %v1690 = vtanh.pop %v1688
    %v1691 = vld [vmem:[%s9] sm:$0x1]
    %v1693 = vlaneseq
    %v1694 = vshrl.u32 %v1693, 7
    %v1695 = vsub.s32 0, %v1694
    %v1696 = vrot.slane %v1691, %v1695
    %v1698 = vmul.f32 %v1689, %v1696
    %v1699 = vmul.f32 %v1690, %v1696
    %v1700 = vsel %vm1561, %v1698, 0.0
    %1701 = vadd.xlane.f32.xlu0 %v1700
    %v1702 = vpop.xlane.xlu0 %1701
    %v1703 = vsel %vm1561, %v1699, 0.0
    %1704 = vadd.xlane.f32.xlu0 %v1703
    %v1705 = vpop.xlane.xlu0 %1704
    %v1706 = vld [vmem:[#allocation2] sm:$0x1]
    %v1708 = vlaneseq
    %v1709 = vshrl.u32 %v1708, 7
    %v1710 = vsub.s32 0, %v1709
    %v1711 = vrot.slane %v1706, %v1710
    %1712 = vset.pattern.permute.xlu0 0
    %1713 = vperm.xlu0 %1712, %v1711
    %v1714 = vpop.permute.xlu0 %1713
    %v1716 = vadd.f32 %v1702, %v1714
    %v1717 = vadd.f32 %v1705, %v1714
    %vm1718 = vcmp.gt.f32.partialorder %v1360, 0.0
    %v1721 = vlaneseq
    %v1722 = vshrl.u32 %v1721, 7
    %v1723 = vsub.s32 %v1366, %v1722
    %v1724 = vrot.slane %v1716, %v1723
    %v1725 = vlaneseq
    %v1726 = vshrl.u32 %v1725, 7
    %v1727 = vsub.s32 %v1366, %v1726
    %v1728 = vrot.slane %v1717, %v1727
    %v1729 = vsel %vm294, %v1728, %v1724
    %v1731 = vsel %vm1718, %v1729, -1e+30
    %v1732 = vsel %vm1361, %v1731, -inf
    %1733 = vmax.xlane.f32.xlu0 %v1732
    %v1734 = vpop.xlane.xlu0 %1733
    %v1735 = vsub.f32 %v1731, %v1734
    %v1736 = vmul.f32 %v1735, 1.442695
    %v1737 = vpow.pop %v1736
    %v1738 = vsel %vm1361, %v1737, 0.0
    %1739 = vadd.xlane.f32.xlu0 %v1738
    %v1740 = vpop.xlane.xlu0 %1739
    %v1741 = vrcp.pop %v1740
    %v1742 = vmul.f32 %v1737, %v1741
    %v1743 = vlaneseq
    %v1744 = vshrl.u32 %v1743, 7
    %v1745 = vsub.s32 0, %v1744
    %v1746 = vrot.slane %v1742, %v1745
    %1748 = vbcast.lane.b32.xlu0 %v1746, 256
    %v1749 = vpop.permute.xlu0 %1748
    %v1750 = vlaneseq
    %v1751 = vshrl.u32 %v1750, 7
    %v1752 = vsub.s32 1, %v1751
    %v1753 = vrot.slane %v1742, %v1752
    %1755 = vbcast.lane.b32.xlu0 %v1753, 256
    %v1756 = vpop.permute.xlu0 %1755
    %v1757 = vmul.f32 %v1749, %v1385
    %v1758 = vmul.f32 %v1756, %v1386
    %vm1759 = vcmask 1048320
    %v1760 = vsel %vm1759, %v1757, 0.0
    %v1761 = vrot.slane %v1760, 4
    %v1762 = vadd.f32 %v1760, %v1761
    %v1763 = vrot.slane %v1762, 2
    %v1764 = vadd.f32 %v1762, %v1763
    %v1765 = vrot.slane %v1764, 1
    %v1766 = vadd.f32 %v1764, %v1765
    %v1767 = vsel %vm1759, %v1758, 0.0
    %v1768 = vrot.slane %v1767, 4
    %v1769 = vadd.f32 %v1767, %v1768
    %v1770 = vrot.slane %v1769, 2
    %v1771 = vadd.f32 %v1769, %v1770
    %v1772 = vrot.slane %v1771, 1
    %v1773 = vadd.f32 %v1771, %v1772
    %v1774 = vld [vmem:[%s12] sm:$0xff]
    %v1775 = vld [vmem:[%s12 + $0x8] sm:$0xff]
    %v1776 = vld [vmem:[%s12 + $0x10] sm:$0xff]
    %v1777 = vld [vmem:[%s12 + $0x18] sm:$0xff]
    %v1778 = vld [vmem:[%s13] sm:$0x1]
    %v1780 = vlaneseq
    %v1781 = vshrl.u32 %v1780, 7
    %v1782 = vsub.s32 0, %v1781
    %v1783 = vrot.slane %v1778, %v1782
    %v1787 = vsel %vm294, %v1773, %v1766
    %1788 = vrot.lane.b32.xlu0 %v1787, 32
    %v1789 = vpop.permute.xlu0 %1788
    %v1790 = vsel %vm63, %v1789, 0
    %1792 = vmatprep.subr.mxu0 0.0
    %1793 = vmatpush1.msra.mxu0 %v1774
    %1794 = vmatprep.subr.mxu0 0.0
    %1795 = vmatpush1.msra.mxu0 %v1775
    %1796 = vmatprep.subr.mxu0 0.0
    %1797 = vmatpush1.msra.mxu0 %v1776
    %1798 = vmatprep.subr.mxu0 0.0
    %1799 = vmatpush1.msra.mxu0 %v1777
    %1800 = vmatprep.subr.mxu0 0.0
    %1801 = vmatpush1.msra.mxu0 0.0
    %1802 = vmatprep.subr.mxu0 0.0
    %1803 = vmatpush1.msra.mxu0 0.0
    %1804 = vmatprep.subr.mxu0 0.0
    %1805 = vmatpush1.msra.mxu0 0.0
    %1806 = vmatprep.subr.mxu0 0.0
    %1807 = vmatpush1.msra.mxu0 0.0
    %1808 = vmatprep.subr.mxu0 0.0
    %1809 = vmatpush1.msra.mxu0 0.0
    %1810 = vmatprep.subr.mxu0 0.0
    %1811 = vmatpush1.msra.mxu0 0.0
    %1812 = vmatprep.subr.mxu0 0.0
    %1813 = vmatpush1.msra.mxu0 0.0
    %1814 = vmatprep.subr.mxu0 0.0
    %1815 = vmatpush1.msra.mxu0 0.0
    %1816 = vmatprep.subr.mxu0 0.0
    %1817 = vmatpush1.msra.mxu0 0.0
    %1818 = vmatprep.subr.mxu0 0.0
    %1819 = vmatpush1.msra.mxu0 0.0
    %1820 = vmatprep.subr.mxu0 0.0
    %1821 = vmatpush1.msra.mxu0 0.0
    %1822 = vmatprep.subr.mxu0 0.0
    %1823 = vmatpush1.msra.mxu0 0.0
    %1824 = vmatprep.subr.mxu0 0.0
    %1825 = vmatpush1.msra.mxu0 0.0
    %1826 = vmatprep.subr.mxu0 0.0
    %1827 = vmatpush1.msra.mxu0 0.0
    %1828 = vmatprep.subr.mxu0 0.0
    %1829 = vmatpush1.msra.mxu0 0.0
    %1830 = vmatprep.subr.mxu0 0.0
    %1831 = vmatpush1.msra.mxu0 0.0
    %1832 = vmatprep.subr.mxu0 0.0
    %1833 = vmatpush1.msra.mxu0 0.0
    %1834 = vmatprep.subr.mxu0 0.0
    %1835 = vmatpush1.msra.mxu0 0.0
    %1836 = vmatprep.subr.mxu0 0.0
    %1837 = vmatpush1.msra.mxu0 0.0
    %1838 = vmatprep.subr.mxu0 0.0
    %1839 = vmatpush1.msra.mxu0 0.0
    %1840 = vmatprep.subr.mxu0 0.0
    %1841 = vmatpush1.msra.mxu0 0.0
    %1842 = vmatprep.subr.mxu0 0.0
    %1843 = vmatpush1.msra.mxu0 0.0
    %1844 = vmatprep.subr.mxu0 0.0
    %1845 = vmatpush1.msra.mxu0 0.0
    %1846 = vmatprep.subr.mxu0 0.0
    %1847 = vmatpush1.msra.mxu0 0.0
    %1848 = vmatprep.subr.mxu0 0.0
    %1849 = vmatpush1.msra.mxu0 0.0
    %1850 = vmatprep.subr.mxu0 0.0
    %1851 = vmatpush1.msra.mxu0 0.0
    %1852 = vmatprep.subr.mxu0 0.0
    %1853 = vmatpush1.msra.mxu0 0.0
    %1854 = vmatprep.subr.mxu0 0.0
    %1855 = vmatpush1.msra.mxu0 0.0
    %1856 = vmatprep.mubr.f32.mxu0 0.0
    %1857 = vmatmul.mubr.f32.gmra.mrb[0].mxu0 %v1790
    %v1858 = vpop.f32.mrb[0].mxu0
    %v1859 = vadd.f32 %v1783, %v1858
    %v1860 = vpop.f32.mrb[0].mxu0
    %1861 = vdwg.mxu0
    %vm1862 = vcmask 33792
    %1863 = vst.msk [vmem:[#allocation3] sm:$0x3] %vm1862, %v1859
    // Predicated region
    $region58: #{pallas_forward.1} parent=1 // pred_check
      _
    $region59: #{pallas_forward.1} parent=1 // pred_check_branch
      %1865 = sbr.rel (0) target = $region61
    $region60: #{pallas_forward.1} parent=1 // pred_region
      %s1867 = ssub.s32 32, 32
      %1868 = vsyncadd [#allocation4], %s1867
      %s1870 = sshll.u32 [#allocation3], 4
      %s1871 = int_to_ptr.vmem [resolvable:$true] %s1870
      %1873 = dma.vmem_to_hbm [thread:$0]  %s1871, 32, %s14, [#allocation4]
    $region61: #{pallas_forward.1} parent=1 // pred_fallthru
      _
    // Predicated region
    $region62: #{pallas_forward.1} parent=1 // pred_check
      _
    $region63: #{pallas_forward.1} parent=1 // pred_check_branch
      %1875 = sbr.rel (0) target = $region65
    $region64: #{pallas_forward.1} parent=1 // pred_region
      %1876 = dma.done [#allocation4], 32
    $region65: #{pallas_forward.1} parent=1 // pred_fallthru
      _
    %1877 = vsyncpa [#allocation4], 1

</llo_original>
